<compile_context>
chip_gen: v7x
topology: tpu7x:2x2x1
jax: 0.10.0
libtpu: 0.0.40
codegen_flags: <defaults>
</compile_context>

<pallas_src>
import math

import jax
import jax.numpy as jnp
import numpy as np
from jax import lax
from jax.experimental import pallas as pl
from jax.experimental.pallas import tpu as pltpu


def _make_fused_bidir_lstm_kernel(seq_len: int, batch: int, hidden_size: int):
    """Kernel running BOTH LSTM directions fused over T steps (no grid axis)."""
    T, B, H = seq_len, batch, hidden_size
    H2 = 2 * H       # fused hidden width: [fwd | bwd]
    G = 8 * H        # fused gate width:   [i_f i_b | f_f f_b | g_f g_b | o_f o_b]

    def kernel(xc_ref, wih_ref, whh_ref, b_ref, out_ref, pre_ref):
        # xc_ref:  (T*B, 2D)   row block t = [x_t | x_{T-1-t}]   (fwd / bwd inputs)
        # wih_ref: (2D, 8H)    block-diagonal fused input->hidden weights
        # whh_ref: (2H, 8H)    block-diagonal fused hidden->hidden weights
        # b_ref:   (1, 8H)     fused combined bias (b_ih + b_hh)
        # out_ref: (T*B, 2H)   fused hidden states, already in (T, B, 2H) layout
        # pre_ref: (T*B, 8H)   scratch: hoisted input projections (f32)

        # --- Hoisted input projection for both directions: one lane-dense matmul,
        #     bias broadcast once, outside the recurrence. ---
        pre_ref[...] = (
            jnp.dot(xc_ref[...], wih_ref[...], preferred_element_type=jnp.float32)
            + b_ref[...]
        )

        w_hh = whh_ref[...]  # recurrent weights resident across the whole loop

        # Lane constants for the single-EUP-pass activation (hoisted, loop-invariant):
        #   i/f/o lanes: sigmoid(x) = 0.5 * tanh(0.5 * x) + 0.5
        #   g lanes    : tanh(x)
        lane = lax.broadcasted_iota(jnp.int32, (B, G), 1)
        is_g = (lane >= 4 * H) & (lane < 6 * H)
        pre_scale = jnp.where(is_g, 1.0, 0.5).astype(jnp.float32)
        post_mul = pre_scale                                        # 1.0 (g) / 0.5 (i,f,o)
        post_add = jnp.where(is_g, 0.0, 0.5).astype(jnp.float32)    # 0.0 (g) / 0.5 (i,f,o)

        h = jnp.zeros((B, H2), jnp.float32)
        c = jnp.zeros((B, H2), jnp.float32)

        # Static Python loop: T is a compile-time int and small here, so every
        # slice below is static.  TODO(synk): for long sequences, move this to a
        # T-tiled "arbitrary" grid axis with h/c carried in VMEM scratch.
        for t in range(T):
            # One fused (B, 2H) x (2H, 8H) MXU matmul for all 4 gates of both dirs.
            gates = pre_ref[t * B:(t + 1) * B, :] + jnp.dot(
                h, w_hh, preferred_element_type=jnp.float32)
            # One whole-vreg tanh pass, then lane-masked affine to realize sigmoid.
            act = jnp.tanh(gates * pre_scale) * post_mul + post_add
            i_g = act[:, 0 * H2:1 * H2]
            f_g = act[:, 1 * H2:2 * H2]
            g_g = act[:, 2 * H2:3 * H2]
            o_g = act[:, 3 * H2:4 * H2]
            c = f_g * c + i_g * g_g
            h = o_g * jnp.tanh(c)
            # Write directly into the interleaved (T, B, 2H) output layout:
            # fwd hidden belongs to time t, bwd hidden to time T-1-t.  These are
            # VMEM-resident stores; HBM writeback is one bulk DMA at the end.
            out_ref[t * B:(t + 1) * B, :H] = h[:, :H]
            out_ref[(T - 1 - t) * B:(T - t) * B, H:] = h[:, H:]

    return kernel


def _interleave_gates(w_f, w_b, hidden_size):
    """(R, 4H) fwd + (R, 4H) bwd -> (R, 8H) with per-gate [fwd | bwd] column blocks.

    Gate order along 4H is PyTorch's (i, f, g, o); fused order along 8H is
    [i_f i_b | f_f f_b | g_f g_b | o_f o_b].
    """
    H = hidden_size
    cols = []
    for k in range(4):
        cols.append(w_f[:, k * H:(k + 1) * H])
        cols.append(w_b[:, k * H:(k + 1) * H])
    return jnp.concatenate(cols, axis=-1)


def _bidir_lstm_layer(x, w_ih, w_hh, b, hidden_size):
    """One bidirectional LSTM layer as a single fused Pallas call.

    Args:
      x:    (T, B, D)   float32
      w_ih: (2, D, 4H)  stacked [fwd, bwd] input->hidden weights (gate order i,f,g,o)
      w_hh: (2, H, 4H)  stacked [fwd, bwd] hidden->hidden weights
      b:    (2, 1, 4H)  stacked [fwd, bwd] combined biases (b_ih + b_hh)
    Returns:
      (T, B, 2H) with forward hidden states in [..., :H], backward in [..., H:]
      (standard nn.LSTM bidirectional output layout, time-ordered).
    """
    T, B, D = x.shape
    H = hidden_size

    # Block-diagonal fused weights: fwd input/hidden rows feed only fwd gate
    # columns, bwd rows feed only bwd gate columns.
    zeros_ih = jnp.zeros_like(w_ih[0])
    w_ih_fused = jnp.concatenate(
        [_interleave_gates(w_ih[0], zeros_ih, H),
         _interleave_gates(zeros_ih, w_ih[1], H)], axis=0)          # (2D, 8H)
    zeros_hh = jnp.zeros_like(w_hh[0])
    w_hh_fused = jnp.concatenate(
        [_interleave_gates(w_hh[0], zeros_hh, H),
         _interleave_gates(zeros_hh, w_hh[1], H)], axis=0)          # (2H, 8H)
    b_fused = _interleave_gates(b[0], b[1], H)                      # (1, 8H)

    # Pair each time step with its time-reverse so the kernel's recurrence is
    # fully static: row block t of x_comb = [x_t | x_{T-1-t}].
    x_comb = jnp.concatenate([x, x[::-1]], axis=-1).reshape(T * B, 2 * D)

    kernel = _make_fused_bidir_lstm_kernel(T, B, H)

    out = pl.pallas_call(
        kernel,
        out_shape=jax.ShapeDtypeStruct((T * B, 2 * H), jnp.float32),
        grid_spec=pltpu.PrefetchScalarGridSpec(
            num_scalar_prefetch=0,
            grid=(1,),
            in_specs=[
                pl.BlockSpec((T * B, 2 * D), lambda i: (0, 0)),   # x_comb
                pl.BlockSpec((2 * D, 8 * H), lambda i: (0, 0)),   # W_ih fused
                pl.BlockSpec((2 * H, 8 * H), lambda i: (0, 0)),   # W_hh fused
                pl.BlockSpec((1, 8 * H), lambda i: (0, 0)),       # bias fused
            ],
            out_specs=pl.BlockSpec((T * B, 2 * H), lambda i: (0, 0)),
            scratch_shapes=[pltpu.VMEM((T * B, 8 * H), jnp.float32)],
        ),
        compiler_params=pltpu.CompilerParams(
            dimension_semantics=("arbitrary",),
            # Below v7x's 64 MiB physical per-TC VMEM; plenty of headroom for
            # the compiler's internal scratch at these shapes.
            vmem_limit_bytes=48 * 1024 * 1024,
        ),
    )(x_comb, w_ih_fused, w_hh_fused, b_fused)

    # Output is already interleaved [fwd(t) | bwd(t)] per time step.
    return out.reshape(T, B, 2 * H)


def init_observation_lstm_params(key, input_size, hidden_size, num_layers):
    """Deterministic synthetic params in per-direction packed layout.

    Layout per layer: dict with
      w_ih: (2, in_dim, 4H), w_hh: (2, H, 4H), b: (2, 1, 4H)
    (leading axis: 0 = forward direction, 1 = backward direction;
     gate order along the 4H axis is PyTorch's i, f, g, o).
    """
    bound = 1.0 / math.sqrt(hidden_size)
    params = []
    in_dim = input_size
    for _ in range(num_layers):
        key, k1, k2, k3, k4 = jax.random.split(key, 5)
        w_ih = jax.random.uniform(
            k1, (2, in_dim, 4 * hidden_size), jnp.float32, -bound, bound)
        w_hh = jax.random.uniform(
            k2, (2, hidden_size, 4 * hidden_size), jnp.float32, -bound, bound)
        b_ih = jax.random.uniform(
            k3, (2, 1, 4 * hidden_size), jnp.float32, -bound, bound)
        b_hh = jax.random.uniform(
            k4, (2, 1, 4 * hidden_size), jnp.float32, -bound, bound)
        params.append({"w_ih": w_ih, "w_hh": w_hh, "b": b_ih + b_hh})
        in_dim = 2 * hidden_size
    return params


def observation_lstm_forward(x, params, hidden_size):
    """
    Bidirectional stacked LSTM forward (matches nn.LSTM(bidirectional=True)).

    Args:
      x: (seq_len, batch, input_size) float32
    Returns:
      g_fwd: (seq_len, batch, hidden_size)  -- g_fwd[t] encodes x_{1:t}
      g_bwd: (seq_len, batch, hidden_size)  -- g_bwd[t] encodes x_{t:T}
    """
    layer_in = x
    for layer in params:
        layer_in = _bidir_lstm_layer(
            layer_in, layer["w_ih"], layer["w_hh"], layer["b"], hidden_size)
    g_fwd = layer_in[:, :, :hidden_size]
    g_bwd = layer_in[:, :, hidden_size:]
    return g_fwd, g_bwd


def _reference_forward(x, params, hidden_size):
    """Pure-JAX reference (lax.scan) using the unfused per-direction weights."""
    H = hidden_size

    def one_dir(seq, w_ih, w_hh, b):
        B = seq.shape[1]
        h0 = jnp.zeros((B, H), jnp.float32)
        c0 = jnp.zeros((B, H), jnp.float32)

        def step(carry, x_t):
            h, c = carry
            gates = x_t @ w_ih + h @ w_hh + b
            i = jax.nn.sigmoid(gates[:, 0 * H:1 * H])
            f = jax.nn.sigmoid(gates[:, 1 * H:2 * H])
            g_ = jnp.tanh(gates[:, 2 * H:3 * H])
            o = jax.nn.sigmoid(gates[:, 3 * H:4 * H])
            c_new = f * c + i * g_
            h_new = o * jnp.tanh(c_new)
            return (h_new, c_new), h_new

        _, hs = lax.scan(step, (h0, c0), seq)
        return hs

    layer_in = x
    for layer in params:
        out_f = one_dir(layer_in, layer["w_ih"][0], layer["w_hh"][0], layer["b"][0])
        out_b = one_dir(layer_in[::-1], layer["w_ih"][1], layer["w_hh"][1],
                        layer["b"][1])[::-1]
        layer_in = jnp.concatenate([out_f, out_b], axis=-1)
    return layer_in[:, :, :H], layer_in[:, :, H:]


if __name__ == "__main__":
    seq_len, batch, input_size, hidden_size, num_layers = 8, 2, 16, 32, 2

    key = jax.random.PRNGKey(0)
    key, kx = jax.random.split(key)
    x = jax.random.normal(kx, (seq_len, batch, input_size), jnp.float32)

    params = init_observation_lstm_params(key, input_size, hidden_size, num_layers)

    g_fwd, g_bwd = observation_lstm_forward(x, params, hidden_size)
    g_fwd, g_bwd = jax.block_until_ready((g_fwd, g_bwd))

    assert g_fwd.shape == (seq_len, batch, hidden_size)
    assert g_bwd.shape == (seq_len, batch, hidden_size)

    ref_fwd, ref_bwd = _reference_forward(x, params, hidden_size)
    np.testing.assert_allclose(np.asarray(g_fwd), np.asarray(ref_fwd),
                               rtol=1e-3, atol=1e-3)
    np.testing.assert_allclose(np.asarray(g_bwd), np.asarray(ref_bwd),
                               rtol=1e-3, atol=1e-3)

    print("KERNEL_OK")
</pallas_src>

<mosaic_0001>
module attributes {stable_mosaic.version = 11 : i64} {
  func.func @kernel(%arg0: i32, %arg1: memref<16x32xf32, #tpu.memory_space<vmem>>, %arg2: memref<32x256xf32, #tpu.memory_space<vmem>>, %arg3: memref<64x256xf32, #tpu.memory_space<vmem>>, %arg4: memref<1x256xf32, #tpu.memory_space<vmem>>, %arg5: memref<16x64xf32, #tpu.memory_space<vmem>>, %arg6: memref<16x256xf32, #tpu.memory_space<vmem>>) attributes {dimension_semantics = [#tpu.dimension_semantics<arbitrary>], iteration_bounds = array<i64: 1>, scalar_prefetch = 0 : i64, scratch_operands = 1 : i64, tpu.core_type = #tpu.core_type<tc>, window_params = [{pipeline_mode = #tpu.pipeline_mode<synchronous>, transform_indices = @transform_0, window_bounds = array<i64: 16, 32>}, {pipeline_mode = #tpu.pipeline_mode<synchronous>, transform_indices = @transform_1, window_bounds = array<i64: 32, 256>}, {pipeline_mode = #tpu.pipeline_mode<synchronous>, transform_indices = @transform_2, window_bounds = array<i64: 64, 256>}, {pipeline_mode = #tpu.pipeline_mode<synchronous>, transform_indices = @transform_3, window_bounds = array<i64: 1, 256>}, {pipeline_mode = #tpu.pipeline_mode<synchronous>, transform_indices = @transform_4, window_bounds = array<i64: 16, 64>}]} {
    %c0 = arith.constant 0 : index
    %c0_0 = arith.constant 0 : index
    %0 = vector.load %arg1[%c0, %c0_0] : memref<16x32xf32, #tpu.memory_space<vmem>>, vector<16x32xf32>
    %c0_1 = arith.constant 0 : index
    %c0_2 = arith.constant 0 : index
    %1 = vector.load %arg2[%c0_1, %c0_2] : memref<32x256xf32, #tpu.memory_space<vmem>>, vector<32x256xf32>
    %cst = arith.constant dense<0.000000e+00> : vector<16x256xf32>
    %2 = tpu.matmul %0, %1, %cst {dimension_numbers = #tpu.dot_dimension_numbers<[1], [0], [0], [1], [0, 0, 1, 1], [], []>} : vector<16x32xf32>, vector<32x256xf32>, vector<16x256xf32> -> vector<16x256xf32>
    %c0_3 = arith.constant 0 : index
    %c0_4 = arith.constant 0 : index
    %3 = vector.load %arg4[%c0_3, %c0_4] : memref<1x256xf32, #tpu.memory_space<vmem>>, vector<1x256xf32>
    %4 = vector.broadcast %3 : vector<1x256xf32> to vector<16x256xf32>
    %5 = arith.addf %2, %4 : vector<16x256xf32>
    %c0_5 = arith.constant 0 : index
    %c0_6 = arith.constant 0 : index
    %6 = vector.load %arg6[%c0_5, %c0_6] : memref<16x256xf32, #tpu.memory_space<vmem>>, vector<16x256xf32>
    tpu.vector_store %arg6[%c0_5, %c0_6], %5 {strides = array<i32>} : memref<16x256xf32, #tpu.memory_space<vmem>>, vector<16x256xf32>,
    %c0_7 = arith.constant 0 : index
    %c0_8 = arith.constant 0 : index
    %7 = vector.load %arg3[%c0_7, %c0_8] : memref<64x256xf32, #tpu.memory_space<vmem>>, vector<64x256xf32>
    %8 = tpu.iota {dimensions = array<i32: 1>} : vector<2x256xi32>
    %c128_i32 = arith.constant 128 : i32
    %9 = vector.broadcast %c128_i32 : i32 to vector<2x256xi32>
    %10 = arith.cmpi sge, %8, %9 : vector<2x256xi32>
    %c192_i32 = arith.constant 192 : i32
    %11 = vector.broadcast %c192_i32 : i32 to vector<2x256xi32>
    %12 = arith.cmpi slt, %8, %11 : vector<2x256xi32>
    %13 = arith.andi %10, %12 : vector<2x256xi1>
    %cst_9 = arith.constant 1.000000e+00 : f32
    %cst_10 = arith.constant 5.000000e-01 : f32
    %14 = vector.broadcast %cst_9 : f32 to vector<2x256xf32>
    %15 = vector.broadcast %cst_10 : f32 to vector<2x256xf32>
    %16 = arith.select %13, %14, %15 : vector<2x256xi1>, vector<2x256xf32>
    %cst_11 = arith.constant 0.000000e+00 : f32
    %cst_12 = arith.constant 5.000000e-01 : f32
    %17 = vector.broadcast %cst_11 : f32 to vector<2x256xf32>
    %18 = vector.broadcast %cst_12 : f32 to vector<2x256xf32>
    %19 = arith.select %13, %17, %18 : vector<2x256xi1>, vector<2x256xf32>
    %cst_13 = arith.constant 0.000000e+00 : f32
    %20 = vector.broadcast %cst_13 : f32 to vector<2x64xf32>
    %cst_14 = arith.constant 0.000000e+00 : f32
    %21 = vector.broadcast %cst_14 : f32 to vector<2x64xf32>
    %c0_15 = arith.constant 0 : index
    %c0_16 = arith.constant 0 : index
    %22 = vector.load %arg6[%c0_15, %c0_16] : memref<16x256xf32, #tpu.memory_space<vmem>>, vector<2x256xf32>
    %cst_17 = arith.constant dense<0.000000e+00> : vector<2x256xf32>
    %23 = tpu.matmul %20, %7, %cst_17 {dimension_numbers = #tpu.dot_dimension_numbers<[1], [0], [0], [1], [0, 0, 1, 1], [], []>} : vector<2x64xf32>, vector<64x256xf32>, vector<2x256xf32> -> vector<2x256xf32>
    %24 = arith.addf %22, %23 : vector<2x256xf32>
    %25 = arith.mulf %24, %16 : vector<2x256xf32>
    %26 = math.tanh %25 : vector<2x256xf32>
    %27 = arith.mulf %26, %16 : vector<2x256xf32>
    %28 = arith.addf %27, %19 : vector<2x256xf32>
    %29 = vector.extract_strided_slice %28 {offsets = [0, 0], sizes = [2, 64], strides = [1, 1]} : vector<2x256xf32> to vector<2x64xf32>
    %30 = vector.extract_strided_slice %28 {offsets = [0, 64], sizes = [2, 64], strides = [1, 1]} : vector<2x256xf32> to vector<2x64xf32>
    %31 = vector.extract_strided_slice %28 {offsets = [0, 128], sizes = [2, 64], strides = [1, 1]} : vector<2x256xf32> to vector<2x64xf32>
    %32 = vector.extract_strided_slice %28 {offsets = [0, 192], sizes = [2, 64], strides = [1, 1]} : vector<2x256xf32> to vector<2x64xf32>
    %33 = arith.mulf %30, %21 : vector<2x64xf32>
    %34 = arith.mulf %29, %31 : vector<2x64xf32>
    %35 = arith.addf %33, %34 : vector<2x64xf32>
    %36 = math.tanh %35 : vector<2x64xf32>
    %37 = arith.mulf %32, %36 : vector<2x64xf32>
    %38 = vector.extract_strided_slice %37 {offsets = [0, 0], sizes = [2, 32], strides = [1, 1]} : vector<2x64xf32> to vector<2x32xf32>
    %c0_18 = arith.constant 0 : index
    %c0_19 = arith.constant 0 : index
    %39 = vector.load %arg5[%c0_18, %c0_19] : memref<16x64xf32, #tpu.memory_space<vmem>>, vector<2x32xf32>
    tpu.vector_store %arg5[%c0_18, %c0_19], %38 {strides = array<i32>} : memref<16x64xf32, #tpu.memory_space<vmem>>, vector<2x32xf32>,
    %40 = vector.extract_strided_slice %37 {offsets = [0, 32], sizes = [2, 32], strides = [1, 1]} : vector<2x64xf32> to vector<2x32xf32>
    %c14 = arith.constant 14 : index
    %c32 = arith.constant 32 : index
    %41 = vector.load %arg5[%c14, %c32] : memref<16x64xf32, #tpu.memory_space<vmem>>, vector<2x32xf32>
    tpu.vector_store %arg5[%c14, %c32], %40 {strides = array<i32>} : memref<16x64xf32, #tpu.memory_space<vmem>>, vector<2x32xf32>,
    %c2 = arith.constant 2 : index
    %c0_20 = arith.constant 0 : index
    %42 = vector.load %arg6[%c2, %c0_20] : memref<16x256xf32, #tpu.memory_space<vmem>>, vector<2x256xf32>
    %cst_21 = arith.constant dense<0.000000e+00> : vector<2x256xf32>
    %43 = tpu.matmul %37, %7, %cst_21 {dimension_numbers = #tpu.dot_dimension_numbers<[1], [0], [0], [1], [0, 0, 1, 1], [], []>} : vector<2x64xf32>, vector<64x256xf32>, vector<2x256xf32> -> vector<2x256xf32>
    %44 = arith.addf %42, %43 : vector<2x256xf32>
    %45 = arith.mulf %44, %16 : vector<2x256xf32>
    %46 = math.tanh %45 : vector<2x256xf32>
    %47 = arith.mulf %46, %16 : vector<2x256xf32>
    %48 = arith.addf %47, %19 : vector<2x256xf32>
    %49 = vector.extract_strided_slice %48 {offsets = [0, 0], sizes = [2, 64], strides = [1, 1]} : vector<2x256xf32> to vector<2x64xf32>
    %50 = vector.extract_strided_slice %48 {offsets = [0, 64], sizes = [2, 64], strides = [1, 1]} : vector<2x256xf32> to vector<2x64xf32>
    %51 = vector.extract_strided_slice %48 {offsets = [0, 128], sizes = [2, 64], strides = [1, 1]} : vector<2x256xf32> to vector<2x64xf32>
    %52 = vector.extract_strided_slice %48 {offsets = [0, 192], sizes = [2, 64], strides = [1, 1]} : vector<2x256xf32> to vector<2x64xf32>
    %53 = arith.mulf %50, %35 : vector<2x64xf32>
    %54 = arith.mulf %49, %51 : vector<2x64xf32>
    %55 = arith.addf %53, %54 : vector<2x64xf32>
    %56 = math.tanh %55 : vector<2x64xf32>
    %57 = arith.mulf %52, %56 : vector<2x64xf32>
    %58 = vector.extract_strided_slice %57 {offsets = [0, 0], sizes = [2, 32], strides = [1, 1]} : vector<2x64xf32> to vector<2x32xf32>
    %c2_22 = arith.constant 2 : index
    %c0_23 = arith.constant 0 : index
    %59 = vector.load %arg5[%c2_22, %c0_23] : memref<16x64xf32, #tpu.memory_space<vmem>>, vector<2x32xf32>
    tpu.vector_store %arg5[%c2_22, %c0_23], %58 {strides = array<i32>} : memref<16x64xf32, #tpu.memory_space<vmem>>, vector<2x32xf32>,
    %60 = vector.extract_strided_slice %57 {offsets = [0, 32], sizes = [2, 32], strides = [1, 1]} : vector<2x64xf32> to vector<2x32xf32>
    %c12 = arith.constant 12 : index
    %c32_24 = arith.constant 32 : index
    %61 = vector.load %arg5[%c12, %c32_24] : memref<16x64xf32, #tpu.memory_space<vmem>>, vector<2x32xf32>
    tpu.vector_store %arg5[%c12, %c32_24], %60 {strides = array<i32>} : memref<16x64xf32, #tpu.memory_space<vmem>>, vector<2x32xf32>,
    %c4 = arith.constant 4 : index
    %c0_25 = arith.constant 0 : index
    %62 = vector.load %arg6[%c4, %c0_25] : memref<16x256xf32, #tpu.memory_space<vmem>>, vector<2x256xf32>
    %cst_26 = arith.constant dense<0.000000e+00> : vector<2x256xf32>
    %63 = tpu.matmul %57, %7, %cst_26 {dimension_numbers = #tpu.dot_dimension_numbers<[1], [0], [0], [1], [0, 0, 1, 1], [], []>} : vector<2x64xf32>, vector<64x256xf32>, vector<2x256xf32> -> vector<2x256xf32>
    %64 = arith.addf %62, %63 : vector<2x256xf32>
    %65 = arith.mulf %64, %16 : vector<2x256xf32>
    %66 = math.tanh %65 : vector<2x256xf32>
    %67 = arith.mulf %66, %16 : vector<2x256xf32>
    %68 = arith.addf %67, %19 : vector<2x256xf32>
    %69 = vector.extract_strided_slice %68 {offsets = [0, 0], sizes = [2, 64], strides = [1, 1]} : vector<2x256xf32> to vector<2x64xf32>
    %70 = vector.extract_strided_slice %68 {offsets = [0, 64], sizes = [2, 64], strides = [1, 1]} : vector<2x256xf32> to vector<2x64xf32>
    %71 = vector.extract_strided_slice %68 {offsets = [0, 128], sizes = [2, 64], strides = [1, 1]} : vector<2x256xf32> to vector<2x64xf32>
    %72 = vector.extract_strided_slice %68 {offsets = [0, 192], sizes = [2, 64], strides = [1, 1]} : vector<2x256xf32> to vector<2x64xf32>
    %73 = arith.mulf %70, %55 : vector<2x64xf32>
    %74 = arith.mulf %69, %71 : vector<2x64xf32>
    %75 = arith.addf %73, %74 : vector<2x64xf32>
    %76 = math.tanh %75 : vector<2x64xf32>
    %77 = arith.mulf %72, %76 : vector<2x64xf32>
    %78 = vector.extract_strided_slice %77 {offsets = [0, 0], sizes = [2, 32], strides = [1, 1]} : vector<2x64xf32> to vector<2x32xf32>
    %c4_27 = arith.constant 4 : index
    %c0_28 = arith.constant 0 : index
    %79 = vector.load %arg5[%c4_27, %c0_28] : memref<16x64xf32, #tpu.memory_space<vmem>>, vector<2x32xf32>
    tpu.vector_store %arg5[%c4_27, %c0_28], %78 {strides = array<i32>} : memref<16x64xf32, #tpu.memory_space<vmem>>, vector<2x32xf32>,
    %80 = vector.extract_strided_slice %77 {offsets = [0, 32], sizes = [2, 32], strides = [1, 1]} : vector<2x64xf32> to vector<2x32xf32>
    %c10 = arith.constant 10 : index
    %c32_29 = arith.constant 32 : index
    %81 = vector.load %arg5[%c10, %c32_29] : memref<16x64xf32, #tpu.memory_space<vmem>>, vector<2x32xf32>
    tpu.vector_store %arg5[%c10, %c32_29], %80 {strides = array<i32>} : memref<16x64xf32, #tpu.memory_space<vmem>>, vector<2x32xf32>,
    %c6 = arith.constant 6 : index
    %c0_30 = arith.constant 0 : index
    %82 = vector.load %arg6[%c6, %c0_30] : memref<16x256xf32, #tpu.memory_space<vmem>>, vector<2x256xf32>
    %cst_31 = arith.constant dense<0.000000e+00> : vector<2x256xf32>
    %83 = tpu.matmul %77, %7, %cst_31 {dimension_numbers = #tpu.dot_dimension_numbers<[1], [0], [0], [1], [0, 0, 1, 1], [], []>} : vector<2x64xf32>, vector<64x256xf32>, vector<2x256xf32> -> vector<2x256xf32>
    %84 = arith.addf %82, %83 : vector<2x256xf32>
    %85 = arith.mulf %84, %16 : vector<2x256xf32>
    %86 = math.tanh %85 : vector<2x256xf32>
    %87 = arith.mulf %86, %16 : vector<2x256xf32>
    %88 = arith.addf %87, %19 : vector<2x256xf32>
    %89 = vector.extract_strided_slice %88 {offsets = [0, 0], sizes = [2, 64], strides = [1, 1]} : vector<2x256xf32> to vector<2x64xf32>
    %90 = vector.extract_strided_slice %88 {offsets = [0, 64], sizes = [2, 64], strides = [1, 1]} : vector<2x256xf32> to vector<2x64xf32>
    %91 = vector.extract_strided_slice %88 {offsets = [0, 128], sizes = [2, 64], strides = [1, 1]} : vector<2x256xf32> to vector<2x64xf32>
    %92 = vector.extract_strided_slice %88 {offsets = [0, 192], sizes = [2, 64], strides = [1, 1]} : vector<2x256xf32> to vector<2x64xf32>
    %93 = arith.mulf %90, %75 : vector<2x64xf32>
    %94 = arith.mulf %89, %91 : vector<2x64xf32>
    %95 = arith.addf %93, %94 : vector<2x64xf32>
    %96 = math.tanh %95 : vector<2x64xf32>
    %97 = arith.mulf %92, %96 : vector<2x64xf32>
    %98 = vector.extract_strided_slice %97 {offsets = [0, 0], sizes = [2, 32], strides = [1, 1]} : vector<2x64xf32> to vector<2x32xf32>
    %c6_32 = arith.constant 6 : index
    %c0_33 = arith.constant 0 : index
    %99 = vector.load %arg5[%c6_32, %c0_33] : memref<16x64xf32, #tpu.memory_space<vmem>>, vector<2x32xf32>
    tpu.vector_store %arg5[%c6_32, %c0_33], %98 {strides = array<i32>} : memref<16x64xf32, #tpu.memory_space<vmem>>, vector<2x32xf32>,
    %100 = vector.extract_strided_slice %97 {offsets = [0, 32], sizes = [2, 32], strides = [1, 1]} : vector<2x64xf32> to vector<2x32xf32>
    %c8 = arith.constant 8 : index
    %c32_34 = arith.constant 32 : index
    %101 = vector.load %arg5[%c8, %c32_34] : memref<16x64xf32, #tpu.memory_space<vmem>>, vector<2x32xf32>
    tpu.vector_store %arg5[%c8, %c32_34], %100 {strides = array<i32>} : memref<16x64xf32, #tpu.memory_space<vmem>>, vector<2x32xf32>,
    %c8_35 = arith.constant 8 : index
    %c0_36 = arith.constant 0 : index
    %102 = vector.load %arg6[%c8_35, %c0_36] : memref<16x256xf32, #tpu.memory_space<vmem>>, vector<2x256xf32>
    %cst_37 = arith.constant dense<0.000000e+00> : vector<2x256xf32>
    %103 = tpu.matmul %97, %7, %cst_37 {dimension_numbers = #tpu.dot_dimension_numbers<[1], [0], [0], [1], [0, 0, 1, 1], [], []>} : vector<2x64xf32>, vector<64x256xf32>, vector<2x256xf32> -> vector<2x256xf32>
    %104 = arith.addf %102, %103 : vector<2x256xf32>
    %105 = arith.mulf %104, %16 : vector<2x256xf32>
    %106 = math.tanh %105 : vector<2x256xf32>
    %107 = arith.mulf %106, %16 : vector<2x256xf32>
    %108 = arith.addf %107, %19 : vector<2x256xf32>
    %109 = vector.extract_strided_slice %108 {offsets = [0, 0], sizes = [2, 64], strides = [1, 1]} : vector<2x256xf32> to vector<2x64xf32>
    %110 = vector.extract_strided_slice %108 {offsets = [0, 64], sizes = [2, 64], strides = [1, 1]} : vector<2x256xf32> to vector<2x64xf32>
    %111 = vector.extract_strided_slice %108 {offsets = [0, 128], sizes = [2, 64], strides = [1, 1]} : vector<2x256xf32> to vector<2x64xf32>
    %112 = vector.extract_strided_slice %108 {offsets = [0, 192], sizes = [2, 64], strides = [1, 1]} : vector<2x256xf32> to vector<2x64xf32>
    %113 = arith.mulf %110, %95 : vector<2x64xf32>
    %114 = arith.mulf %109, %111 : vector<2x64xf32>
    %115 = arith.addf %113, %114 : vector<2x64xf32>
    %116 = math.tanh %115 : vector<2x64xf32>
    %117 = arith.mulf %112, %116 : vector<2x64xf32>
    %118 = vector.extract_strided_slice %117 {offsets = [0, 0], sizes = [2, 32], strides = [1, 1]} : vector<2x64xf32> to vector<2x32xf32>
    %c8_38 = arith.constant 8 : index
    %c0_39 = arith.constant 0 : index
    %119 = vector.load %arg5[%c8_38, %c0_39] : memref<16x64xf32, #tpu.memory_space<vmem>>, vector<2x32xf32>
    tpu.vector_store %arg5[%c8_38, %c0_39], %118 {strides = array<i32>} : memref<16x64xf32, #tpu.memory_space<vmem>>, vector<2x32xf32>,
    %120 = vector.extract_strided_slice %117 {offsets = [0, 32], sizes = [2, 32], strides = [1, 1]} : vector<2x64xf32> to vector<2x32xf32>
    %c6_40 = arith.constant 6 : index
    %c32_41 = arith.constant 32 : index
    %121 = vector.load %arg5[%c6_40, %c32_41] : memref<16x64xf32, #tpu.memory_space<vmem>>, vector<2x32xf32>
    tpu.vector_store %arg5[%c6_40, %c32_41], %120 {strides = array<i32>} : memref<16x64xf32, #tpu.memory_space<vmem>>, vector<2x32xf32>,
    %c10_42 = arith.constant 10 : index
    %c0_43 = arith.constant 0 : index
    %122 = vector.load %arg6[%c10_42, %c0_43] : memref<16x256xf32, #tpu.memory_space<vmem>>, vector<2x256xf32>
    %cst_44 = arith.constant dense<0.000000e+00> : vector<2x256xf32>
    %123 = tpu.matmul %117, %7, %cst_44 {dimension_numbers = #tpu.dot_dimension_numbers<[1], [0], [0], [1], [0, 0, 1, 1], [], []>} : vector<2x64xf32>, vector<64x256xf32>, vector<2x256xf32> -> vector<2x256xf32>
    %124 = arith.addf %122, %123 : vector<2x256xf32>
    %125 = arith.mulf %124, %16 : vector<2x256xf32>
    %126 = math.tanh %125 : vector<2x256xf32>
    %127 = arith.mulf %126, %16 : vector<2x256xf32>
    %128 = arith.addf %127, %19 : vector<2x256xf32>
    %129 = vector.extract_strided_slice %128 {offsets = [0, 0], sizes = [2, 64], strides = [1, 1]} : vector<2x256xf32> to vector<2x64xf32>
    %130 = vector.extract_strided_slice %128 {offsets = [0, 64], sizes = [2, 64], strides = [1, 1]} : vector<2x256xf32> to vector<2x64xf32>
    %131 = vector.extract_strided_slice %128 {offsets = [0, 128], sizes = [2, 64], strides = [1, 1]} : vector<2x256xf32> to vector<2x64xf32>
    %132 = vector.extract_strided_slice %128 {offsets = [0, 192], sizes = [2, 64], strides = [1, 1]} : vector<2x256xf32> to vector<2x64xf32>
    %133 = arith.mulf %130, %115 : vector<2x64xf32>
    %134 = arith.mulf %129, %131 : vector<2x64xf32>
    %135 = arith.addf %133, %134 : vector<2x64xf32>
    %136 = math.tanh %135 : vector<2x64xf32>
    %137 = arith.mulf %132, %136 : vector<2x64xf32>
    %138 = vector.extract_strided_slice %137 {offsets = [0, 0], sizes = [2, 32], strides = [1, 1]} : vector<2x64xf32> to vector<2x32xf32>
    %c10_45 = arith.constant 10 : index
    %c0_46 = arith.constant 0 : index
    %139 = vector.load %arg5[%c10_45, %c0_46] : memref<16x64xf32, #tpu.memory_space<vmem>>, vector<2x32xf32>
    tpu.vector_store %arg5[%c10_45, %c0_46], %138 {strides = array<i32>} : memref<16x64xf32, #tpu.memory_space<vmem>>, vector<2x32xf32>,
    %140 = vector.extract_strided_slice %137 {offsets = [0, 32], sizes = [2, 32], strides = [1, 1]} : vector<2x64xf32> to vector<2x32xf32>
    %c4_47 = arith.constant 4 : index
    %c32_48 = arith.constant 32 : index
    %141 = vector.load %arg5[%c4_47, %c32_48] : memref<16x64xf32, #tpu.memory_space<vmem>>, vector<2x32xf32>
    tpu.vector_store %arg5[%c4_47, %c32_48], %140 {strides = array<i32>} : memref<16x64xf32, #tpu.memory_space<vmem>>, vector<2x32xf32>,
    %c12_49 = arith.constant 12 : index
    %c0_50 = arith.constant 0 : index
    %142 = vector.load %arg6[%c12_49, %c0_50] : memref<16x256xf32, #tpu.memory_space<vmem>>, vector<2x256xf32>
    %cst_51 = arith.constant dense<0.000000e+00> : vector<2x256xf32>
    %143 = tpu.matmul %137, %7, %cst_51 {dimension_numbers = #tpu.dot_dimension_numbers<[1], [0], [0], [1], [0, 0, 1, 1], [], []>} : vector<2x64xf32>, vector<64x256xf32>, vector<2x256xf32> -> vector<2x256xf32>
    %144 = arith.addf %142, %143 : vector<2x256xf32>
    %145 = arith.mulf %144, %16 : vector<2x256xf32>
    %146 = math.tanh %145 : vector<2x256xf32>
    %147 = arith.mulf %146, %16 : vector<2x256xf32>
    %148 = arith.addf %147, %19 : vector<2x256xf32>
    %149 = vector.extract_strided_slice %148 {offsets = [0, 0], sizes = [2, 64], strides = [1, 1]} : vector<2x256xf32> to vector<2x64xf32>
    %150 = vector.extract_strided_slice %148 {offsets = [0, 64], sizes = [2, 64], strides = [1, 1]} : vector<2x256xf32> to vector<2x64xf32>
    %151 = vector.extract_strided_slice %148 {offsets = [0, 128], sizes = [2, 64], strides = [1, 1]} : vector<2x256xf32> to vector<2x64xf32>
    %152 = vector.extract_strided_slice %148 {offsets = [0, 192], sizes = [2, 64], strides = [1, 1]} : vector<2x256xf32> to vector<2x64xf32>
    %153 = arith.mulf %150, %135 : vector<2x64xf32>
    %154 = arith.mulf %149, %151 : vector<2x64xf32>
    %155 = arith.addf %153, %154 : vector<2x64xf32>
    %156 = math.tanh %155 : vector<2x64xf32>
    %157 = arith.mulf %152, %156 : vector<2x64xf32>
    %158 = vector.extract_strided_slice %157 {offsets = [0, 0], sizes = [2, 32], strides = [1, 1]} : vector<2x64xf32> to vector<2x32xf32>
    %c12_52 = arith.constant 12 : index
    %c0_53 = arith.constant 0 : index
    %159 = vector.load %arg5[%c12_52, %c0_53] : memref<16x64xf32, #tpu.memory_space<vmem>>, vector<2x32xf32>
    tpu.vector_store %arg5[%c12_52, %c0_53], %158 {strides = array<i32>} : memref<16x64xf32, #tpu.memory_space<vmem>>, vector<2x32xf32>,
    %160 = vector.extract_strided_slice %157 {offsets = [0, 32], sizes = [2, 32], strides = [1, 1]} : vector<2x64xf32> to vector<2x32xf32>
    %c2_54 = arith.constant 2 : index
    %c32_55 = arith.constant 32 : index
    %161 = vector.load %arg5[%c2_54, %c32_55] : memref<16x64xf32, #tpu.memory_space<vmem>>, vector<2x32xf32>
    tpu.vector_store %arg5[%c2_54, %c32_55], %160 {strides = array<i32>} : memref<16x64xf32, #tpu.memory_space<vmem>>, vector<2x32xf32>,
    %c14_56 = arith.constant 14 : index
    %c0_57 = arith.constant 0 : index
    %162 = vector.load %arg6[%c14_56, %c0_57] : memref<16x256xf32, #tpu.memory_space<vmem>>, vector<2x256xf32>
    %cst_58 = arith.constant dense<0.000000e+00> : vector<2x256xf32>
    %163 = tpu.matmul %157, %7, %cst_58 {dimension_numbers = #tpu.dot_dimension_numbers<[1], [0], [0], [1], [0, 0, 1, 1], [], []>} : vector<2x64xf32>, vector<64x256xf32>, vector<2x256xf32> -> vector<2x256xf32>
    %164 = arith.addf %162, %163 : vector<2x256xf32>
    %165 = arith.mulf %164, %16 : vector<2x256xf32>
    %166 = math.tanh %165 : vector<2x256xf32>
    %167 = arith.mulf %166, %16 : vector<2x256xf32>
    %168 = arith.addf %167, %19 : vector<2x256xf32>
    %169 = vector.extract_strided_slice %168 {offsets = [0, 0], sizes = [2, 64], strides = [1, 1]} : vector<2x256xf32> to vector<2x64xf32>
    %170 = vector.extract_strided_slice %168 {offsets = [0, 64], sizes = [2, 64], strides = [1, 1]} : vector<2x256xf32> to vector<2x64xf32>
    %171 = vector.extract_strided_slice %168 {offsets = [0, 128], sizes = [2, 64], strides = [1, 1]} : vector<2x256xf32> to vector<2x64xf32>
    %172 = vector.extract_strided_slice %168 {offsets = [0, 192], sizes = [2, 64], strides = [1, 1]} : vector<2x256xf32> to vector<2x64xf32>
    %173 = arith.mulf %170, %155 : vector<2x64xf32>
    %174 = arith.mulf %169, %171 : vector<2x64xf32>
    %175 = arith.addf %173, %174 : vector<2x64xf32>
    %176 = math.tanh %175 : vector<2x64xf32>
    %177 = arith.mulf %172, %176 : vector<2x64xf32>
    %178 = vector.extract_strided_slice %177 {offsets = [0, 0], sizes = [2, 32], strides = [1, 1]} : vector<2x64xf32> to vector<2x32xf32>
    %c14_59 = arith.constant 14 : index
    %c0_60 = arith.constant 0 : index
    %179 = vector.load %arg5[%c14_59, %c0_60] : memref<16x64xf32, #tpu.memory_space<vmem>>, vector<2x32xf32>
    tpu.vector_store %arg5[%c14_59, %c0_60], %178 {strides = array<i32>} : memref<16x64xf32, #tpu.memory_space<vmem>>, vector<2x32xf32>,
    %180 = vector.extract_strided_slice %177 {offsets = [0, 32], sizes = [2, 32], strides = [1, 1]} : vector<2x64xf32> to vector<2x32xf32>
    %c0_61 = arith.constant 0 : index
    %c32_62 = arith.constant 32 : index
    %181 = vector.load %arg5[%c0_61, %c32_62] : memref<16x64xf32, #tpu.memory_space<vmem>>, vector<2x32xf32>
    tpu.vector_store %arg5[%c0_61, %c32_62], %180 {strides = array<i32>} : memref<16x64xf32, #tpu.memory_space<vmem>>, vector<2x32xf32>,
    return
  }
  func.func @transform_0(%arg0: i32) -> (i32, i32) {
    %c0_i32 = arith.constant 0 : i32
    %c0_i32_0 = arith.constant 0 : i32
    %c0_i32_1 = arith.constant 0 : i32
    return %c0_i32, %c0_i32_0 : i32, i32
  }
  func.func @transform_1(%arg0: i32) -> (i32, i32) {
    %c0_i32 = arith.constant 0 : i32
    %c0_i32_0 = arith.constant 0 : i32
    %c0_i32_1 = arith.constant 0 : i32
    return %c0_i32, %c0_i32_0 : i32, i32
  }
  func.func @transform_2(%arg0: i32) -> (i32, i32) {
    %c0_i32 = arith.constant 0 : i32
    %c0_i32_0 = arith.constant 0 : i32
    %c0_i32_1 = arith.constant 0 : i32
    return %c0_i32, %c0_i32_0 : i32, i32
  }
  func.func @transform_3(%arg0: i32) -> (i32, i32) {
    %c0_i32 = arith.constant 0 : i32
    %c0_i32_0 = arith.constant 0 : i32
    %c0_i32_1 = arith.constant 0 : i32
    return %c0_i32, %c0_i32_0 : i32, i32
  }
  func.func @transform_4(%arg0: i32) -> (i32, i32) {
    %c0_i32 = arith.constant 0 : i32
    %c0_i32_0 = arith.constant 0 : i32
    %c0_i32_1 = arith.constant 0 : i32
    return %c0_i32, %c0_i32_0 : i32, i32
  }
}

</mosaic_0001>

<llo_original>
// kernel: tpu_custom_call.1
$region0: #{tpu_custom_call.1}
  #allocation0 [shape = 'u32[]', space=smem, size = 0x4, offset = 0x4, fixed_abs, tag = 'smem constant byte address 0x4 - core index']
  #allocation1 [shape = 'u32[144,128]{1,0:T(1,128)}', space=vmem, size = 0x12000, scoped, tag = 'internal scratch']
  #allocation2 [shape = 'f32[16,256]{1,0:T(8,128)}', space=vmem, size = 0x4000, scoped, tag = 'scratch operand']
  %s0 = inlined_call_operand.hbm [shape: f32[16,32], index: 0, kind: input, shape index: {}]
  %s1 = inlined_call_operand.hbm [shape: f32[32,256], index: 1, kind: input, shape index: {}]
  %s2 = inlined_call_operand.hbm [shape: f32[64,256], index: 2, kind: input, shape index: {}]
  %s3 = inlined_call_operand.vmem [shape: f32[1,256], index: 3, kind: input, shape index: {}]
  %s4 = inlined_call_operand.hbm [shape: f32[16,64], index: 4, kind: output, shape index: {}]
  %s5 = sld [smem:[#allocation0]]
  $region38: #{tpu_custom_call.1} parent=0
    _
  %s7 = ssub.s32 1, %s5
  %s8 = scalar_select 0, %s7, %s5
  $region1: #{tpu_custom_call.1} parent=0
    #allocation3 [shape = 'u8[8192]{0}', space=vmem, size = 0x2000, scoped, tag = 'input window, operand 0, single buffered']
    #allocation4 [shape = 's32[1]{0}', space=sflag, size = 0x4, scoped, tag = 'scoped memory for tpu_custom_call.1']
    #allocation5 [shape = 's32[1]{0}', space=sflag, size = 0x4, scoped, tag = 'scoped memory for tpu_custom_call.1']
    #allocation6 [shape = 'u8[32768]{0}', space=vmem, size = 0x8000, scoped, tag = 'input window, operand 1, single buffered']
    #allocation7 [shape = 's32[1]{0}', space=sflag, size = 0x4, scoped, tag = 'scoped memory for tpu_custom_call.1']
    #allocation8 [shape = 'u8[65536]{0}', space=vmem, size = 0x10000, scoped, tag = 'input window, operand 2, single buffered']
    #allocation9 [shape = 'u8[8192]{0}', space=vmem, size = 0x2000, scoped, tag = 'output window, operand 0, single buffered']
    %9 = vsyncpa [#allocation4], 0
    %10 = vsyncpa [#allocation7], 0
    %11 = vsyncpa [#allocation5], 0
    // Predicated region
    $region2: #{tpu_custom_call.1} parent=1 // pred_check
      _
    $region3: #{tpu_custom_call.1} parent=1 // pred_check_branch
      %13 = sbr.rel (0) target = $region5
    $region4: #{tpu_custom_call.1} parent=1 // pred_region
      %s15 = ssub.s32 256, 256
      %16 = vsyncadd [#allocation4], %s15
      %s17 = sshll.u32 [#allocation3], 4
      %s18 = int_to_ptr.vmem [resolvable:$true] %s17
      %23 = dma.hbm_to_vmem [thread:$0]  %s0, 256, %s18, [#allocation4], 128, 128, 8
    $region5: #{tpu_custom_call.1} parent=1 // pred_fallthru
      _
    // Predicated region
    $region6: #{tpu_custom_call.1} parent=1 // pred_check
      _
    $region7: #{tpu_custom_call.1} parent=1 // pred_check_branch
      %25 = sbr.rel (0) target = $region9
    $region8: #{tpu_custom_call.1} parent=1 // pred_region
      %s27 = ssub.s32 1024, 1024
      %28 = vsyncadd [#allocation7], %s27
      %s29 = sshll.u32 [#allocation6], 4
      %s30 = int_to_ptr.vmem [resolvable:$true] %s29
      %35 = dma.hbm_to_vmem [thread:$0]  %s1, 1024, %s30, [#allocation7], 256, 256, 16
    $region9: #{tpu_custom_call.1} parent=1 // pred_fallthru
      _
    // Predicated region
    $region10: #{tpu_custom_call.1} parent=1 // pred_check
      _
    $region11: #{tpu_custom_call.1} parent=1 // pred_check_branch
      %37 = sbr.rel (0) target = $region13
    $region12: #{tpu_custom_call.1} parent=1 // pred_region
      %s39 = ssub.s32 2048, 2048
      %40 = vsyncadd [#allocation7], %s39
      %s41 = sshll.u32 [#allocation8], 4
      %s42 = int_to_ptr.vmem [resolvable:$true] %s41
      %47 = dma.hbm_to_vmem [thread:$0]  %s2, 2048, %s42, [#allocation7], 256, 256, 16
    $region13: #{tpu_custom_call.1} parent=1 // pred_fallthru
      _
    // Predicated region
    $region14: #{tpu_custom_call.1} parent=1 // pred_check
      _
    $region15: #{tpu_custom_call.1} parent=1 // pred_check_branch
      %49 = sbr.rel (0) target = $region17
    $region16: #{tpu_custom_call.1} parent=1 // pred_region
      _
    $region17: #{tpu_custom_call.1} parent=1 // pred_fallthru
      _
    // Predicated region
    $region18: #{tpu_custom_call.1} parent=1 // pred_check
      _
    $region19: #{tpu_custom_call.1} parent=1 // pred_check_branch
      %51 = sbr.rel (0) target = $region21
    $region20: #{tpu_custom_call.1} parent=1 // pred_region
      %52 = dma.done [#allocation4], 256
    $region21: #{tpu_custom_call.1} parent=1 // pred_fallthru
      _
    // Predicated region
    $region22: #{tpu_custom_call.1} parent=1 // pred_check
      _
    $region23: #{tpu_custom_call.1} parent=1 // pred_check_branch
      %54 = sbr.rel (0) target = $region25
    $region24: #{tpu_custom_call.1} parent=1 // pred_region
      %55 = dma.done [#allocation7], 1024
    $region25: #{tpu_custom_call.1} parent=1 // pred_fallthru
      _
    // Predicated region
    $region26: #{tpu_custom_call.1} parent=1 // pred_check
      _
    $region27: #{tpu_custom_call.1} parent=1 // pred_check_branch
      %57 = sbr.rel (0) target = $region29
    $region28: #{tpu_custom_call.1} parent=1 // pred_region
      %58 = dma.done [#allocation7], 2048
    $region29: #{tpu_custom_call.1} parent=1 // pred_fallthru
      _
    %v59 = vld [vmem:[#allocation3] sm:$0xff]
    %v60 = vld [vmem:[#allocation3 + $0x8] sm:$0xff]
    %v61 = vld [vmem:[#allocation6] sm:$0xff]
    %v62 = vld [vmem:[#allocation6 + $0x8] sm:$0xff]
    %v63 = vld [vmem:[#allocation6 + $0x10] sm:$0xff]
    %v64 = vld [vmem:[#allocation6 + $0x18] sm:$0xff]
    %v65 = vld [vmem:[#allocation6 + $0x20] sm:$0xff]
    %v66 = vld [vmem:[#allocation6 + $0x28] sm:$0xff]
    %v67 = vld [vmem:[#allocation6 + $0x30] sm:$0xff]
    %v68 = vld [vmem:[#allocation6 + $0x38] sm:$0xff]
    %v69 = vld [vmem:[%s3] sm:$0x3]
    %v71 = vlaneseq
    %v72 = vshrl.u32 %v71, 7
    %v73 = vsub.s32 0, %v72
    %v74 = vrot.slane %v69, %v73
    %v75 = vlaneseq
    %v76 = vshrl.u32 %v75, 7
    %v77 = vsub.s32 1, %v76
    %v78 = vrot.slane %v69, %v77
    %vm81 = vcmask 261120
    %v83 = vsel %vm81, %v59, 0
    %v86 = vsel %vm81, %v60, 0
    %88 = vmatprep.subr.mxu0 %v62
    %89 = vmatpush1.msra.mxu0 %v61
    %90 = vmatprep.subr.mxu0 %v64
    %91 = vmatpush1.msra.mxu0 %v63
    %92 = vmatprep.subr.mxu0 %v66
    %93 = vmatpush1.msra.mxu0 %v65
    %94 = vmatprep.subr.mxu0 %v68
    %95 = vmatpush1.msra.mxu0 %v67
    %96 = vmatprep.subr.mxu0 0.0
    %97 = vmatpush1.msra.mxu0 0.0
    %98 = vmatprep.subr.mxu0 0.0
    %99 = vmatpush1.msra.mxu0 0.0
    %100 = vmatprep.subr.mxu0 0.0
    %101 = vmatpush1.msra.mxu0 0.0
    %102 = vmatprep.subr.mxu0 0.0
    %103 = vmatpush1.msra.mxu0 0.0
    %104 = vmatprep.subr.mxu0 0.0
    %105 = vmatpush1.msra.mxu0 0.0
    %106 = vmatprep.subr.mxu0 0.0
    %107 = vmatpush1.msra.mxu0 0.0
    %108 = vmatprep.subr.mxu0 0.0
    %109 = vmatpush1.msra.mxu0 0.0
    %110 = vmatprep.subr.mxu0 0.0
    %111 = vmatpush1.msra.mxu0 0.0
    %112 = vmatprep.subr.mxu0 0.0
    %113 = vmatpush1.msra.mxu0 0.0
    %114 = vmatprep.subr.mxu0 0.0
    %115 = vmatpush1.msra.mxu0 0.0
    %116 = vmatprep.subr.mxu0 0.0
    %117 = vmatpush1.msra.mxu0 0.0
    %118 = vmatprep.subr.mxu0 0.0
    %119 = vmatpush1.msra.mxu0 0.0
    %120 = vmatprep.subr.mxu0 0.0
    %121 = vmatpush1.msra.mxu0 0.0
    %122 = vmatprep.subr.mxu0 0.0
    %123 = vmatpush1.msra.mxu0 0.0
    %124 = vmatprep.subr.mxu0 0.0
    %125 = vmatpush1.msra.mxu0 0.0
    %126 = vmatprep.subr.mxu0 0.0
    %127 = vmatpush1.msra.mxu0 0.0
    %128 = vmatprep.subr.mxu0 0.0
    %129 = vmatpush1.msra.mxu0 0.0
    %130 = vmatprep.subr.mxu0 0.0
    %131 = vmatpush1.msra.mxu0 0.0
    %132 = vmatprep.subr.mxu0 0.0
    %133 = vmatpush1.msra.mxu0 0.0
    %134 = vmatprep.subr.mxu0 0.0
    %135 = vmatpush1.msra.mxu0 0.0
    %136 = vmatprep.subr.mxu0 0.0
    %137 = vmatpush1.msra.mxu0 0.0
    %138 = vmatprep.subr.mxu0 0.0
    %139 = vmatpush1.msra.mxu0 0.0
    %140 = vmatprep.subr.mxu0 0.0
    %141 = vmatpush1.msra.mxu0 0.0
    %142 = vmatprep.subr.mxu0 0.0
    %143 = vmatpush1.msra.mxu0 0.0
    %144 = vmatprep.subr.mxu0 0.0
    %145 = vmatpush1.msra.mxu0 0.0
    %146 = vmatprep.subr.mxu0 0.0
    %147 = vmatpush1.msra.mxu0 0.0
    %148 = vmatprep.subr.mxu0 0.0
    %149 = vmatpush1.msra.mxu0 0.0
    %150 = vmatprep.subr.mxu0 0.0
    %151 = vmatpush1.msra.mxu0 0.0
    %152 = vmatprep.mubr.f32.mxu0 0.0
    %153 = vmatmul.mubr.f32.gmra.mrb[0].mxu0 %v83
    %v154 = vpop.f32.mrb[0].mxu0
    %v155 = vadd.f32 %v74, %v154
    %v156 = vpop.f32.mrb[0].mxu0
    %v157 = vadd.f32 %v78, %v156
    %158 = vmatprep.mubr.f32.mxu0 0.0
    %159 = vmatmul.mubr.f32.gmra.mrb[0].mxu0 %v86
    %v160 = vpop.f32.mrb[0].mxu0
    %v161 = vadd.f32 %v74, %v160
    %v162 = vpop.f32.mrb[0].mxu0
    %v163 = vadd.f32 %v78, %v162
    %164 = vdwg.mxu0
    %165 = vst [vmem:[#allocation2] sm:$0xff] %v155
    %166 = vst [vmem:[#allocation2 + $0x8] sm:$0xff] %v157
    %167 = vst [vmem:[#allocation2 + $0x10] sm:$0xff] %v161
    %168 = vst [vmem:[#allocation2 + $0x18] sm:$0xff] %v163
    %v169 = vld [vmem:[#allocation8] sm:$0xff]
    %v170 = vld [vmem:[#allocation8 + $0x8] sm:$0xff]
    %v171 = vld [vmem:[#allocation8 + $0x10] sm:$0xff]
    %v172 = vld [vmem:[#allocation8 + $0x18] sm:$0xff]
    %v173 = vld [vmem:[#allocation8 + $0x20] sm:$0xff]
    %v174 = vld [vmem:[#allocation8 + $0x28] sm:$0xff]
    %v175 = vld [vmem:[#allocation8 + $0x30] sm:$0xff]
    %v176 = vld [vmem:[#allocation8 + $0x38] sm:$0xff]
    %v177 = vld [vmem:[#allocation8 + $0x40] sm:$0xff]
    %v178 = vld [vmem:[#allocation8 + $0x48] sm:$0xff]
    %v179 = vld [vmem:[#allocation8 + $0x50] sm:$0xff]
    %v180 = vld [vmem:[#allocation8 + $0x58] sm:$0xff]
    %v181 = vld [vmem:[#allocation8 + $0x60] sm:$0xff]
    %v182 = vld [vmem:[#allocation8 + $0x68] sm:$0xff]
    %v183 = vld [vmem:[#allocation8 + $0x70] sm:$0xff]
    %v184 = vld [vmem:[#allocation8 + $0x78] sm:$0xff]
    %v185 = vlaneseq
    %v186 = vand.u32 %v185, 127
    %v187 = vadd.s32 %v186, 128
    %vm188 = vcmp.ge.s32.totalorder %v186, 128
    %vm189 = vcmp.ge.s32.totalorder %v187, 128
    %vm190 = vcmp.lt.s32.totalorder %v186, 192
    %vm191 = vcmp.lt.s32.totalorder %v187, 192
    %vm192 = vmand %vm188, %vm190
    %vm193 = vmand %vm189, %vm191
    %v194 = vsel %vm192, 1.0, 0.5
    %v195 = vsel %vm193, 1.0, 0.5
    %v196 = vsel %vm192, 0.0, 0.5
    %v197 = vsel %vm193, 0.0, 0.5
    %v198 = vld [vmem:[#allocation2] sm:$0x3]
    %v199 = vld [vmem:[#allocation2 + $0x8] sm:$0x3]
    %vm200 = vcmask 523264
    %v202 = vsel %vm200, 0.0, 0
    %204 = vmatprep.subr.mxu0 %v170
    %205 = vmatpush1.msra.mxu0 %v169
    %206 = vmatprep.subr.mxu0 %v172
    %207 = vmatpush1.msra.mxu0 %v171
    %208 = vmatprep.subr.mxu0 %v174
    %209 = vmatpush1.msra.mxu0 %v173
    %210 = vmatprep.subr.mxu0 %v176
    %211 = vmatpush1.msra.mxu0 %v175
    %212 = vmatprep.subr.mxu0 %v178
    %213 = vmatpush1.msra.mxu0 %v177
    %214 = vmatprep.subr.mxu0 %v180
    %215 = vmatpush1.msra.mxu0 %v179
    %216 = vmatprep.subr.mxu0 %v182
    %217 = vmatpush1.msra.mxu0 %v181
    %218 = vmatprep.subr.mxu0 %v184
    %219 = vmatpush1.msra.mxu0 %v183
    %220 = vmatprep.subr.mxu0 0.0
    %221 = vmatpush1.msra.mxu0 0.0
    %222 = vmatprep.subr.mxu0 0.0
    %223 = vmatpush1.msra.mxu0 0.0
    %224 = vmatprep.subr.mxu0 0.0
    %225 = vmatpush1.msra.mxu0 0.0
    %226 = vmatprep.subr.mxu0 0.0
    %227 = vmatpush1.msra.mxu0 0.0
    %228 = vmatprep.subr.mxu0 0.0
    %229 = vmatpush1.msra.mxu0 0.0
    %230 = vmatprep.subr.mxu0 0.0
    %231 = vmatpush1.msra.mxu0 0.0
    %232 = vmatprep.subr.mxu0 0.0
    %233 = vmatpush1.msra.mxu0 0.0
    %234 = vmatprep.subr.mxu0 0.0
    %235 = vmatpush1.msra.mxu0 0.0
    %236 = vmatprep.subr.mxu0 0.0
    %237 = vmatpush1.msra.mxu0 0.0
    %238 = vmatprep.subr.mxu0 0.0
    %239 = vmatpush1.msra.mxu0 0.0
    %240 = vmatprep.subr.mxu0 0.0
    %241 = vmatpush1.msra.mxu0 0.0
    %242 = vmatprep.subr.mxu0 0.0
    %243 = vmatpush1.msra.mxu0 0.0
    %244 = vmatprep.subr.mxu0 0.0
    %245 = vmatpush1.msra.mxu0 0.0
    %246 = vmatprep.subr.mxu0 0.0
    %247 = vmatpush1.msra.mxu0 0.0
    %248 = vmatprep.subr.mxu0 0.0
    %249 = vmatpush1.msra.mxu0 0.0
    %250 = vmatprep.subr.mxu0 0.0
    %251 = vmatpush1.msra.mxu0 0.0
    %252 = vmatprep.subr.mxu0 0.0
    %253 = vmatpush1.msra.mxu0 0.0
    %254 = vmatprep.subr.mxu0 0.0
    %255 = vmatpush1.msra.mxu0 0.0
    %256 = vmatprep.subr.mxu0 0.0
    %257 = vmatpush1.msra.mxu0 0.0
    %258 = vmatprep.subr.mxu0 0.0
    %259 = vmatpush1.msra.mxu0 0.0
    %260 = vmatprep.subr.mxu0 0.0
    %261 = vmatpush1.msra.mxu0 0.0
    %262 = vmatprep.subr.mxu0 0.0
    %263 = vmatpush1.msra.mxu0 0.0
    %264 = vmatprep.subr.mxu0 0.0
    %265 = vmatpush1.msra.mxu0 0.0
    %266 = vmatprep.subr.mxu0 0.0
    %267 = vmatpush1.msra.mxu0 0.0
    %268 = vmatprep.mubr.f32.mxu0 0.0
    %269 = vmatmul.mubr.f32.gmra.mrb[0].mxu0 %v202
    %v270 = vpop.f32.mrb[0].mxu0
    %v271 = vadd.f32 0.0, %v270
    %v272 = vpop.f32.mrb[0].mxu0
    %v273 = vadd.f32 0.0, %v272
    %274 = vdwg.mxu0
    %v275 = vadd.f32 %v198, %v271
    %v276 = vadd.f32 %v199, %v273
    %v277 = vmul.f32 %v275, %v194
    %v278 = vmul.f32 %v276, %v195
    %v279 = vtanh.pop %v277
    %v280 = vtanh.pop %v278
    %v281 = vmul.f32 %v279, %v194
    %v282 = vmul.f32 %v280, %v195
    %v283 = vadd.f32 %v281, %v196
    %v284 = vadd.f32 %v282, %v197
    %v285 = vmul.f32 %v283, 0.0
    %v286 = vmul.f32 %v283, %v284
    %288 = vrot.lane.b32.xlu0 %v286, 64
    %v289 = vpop.permute.xlu0 %288
    %v291 = vadd.f32 %v285, %v289
    %v292 = vtanh.pop %v291
    %v293 = vmul.f32 %v284, %v292
    %295 = vrot.lane.b32.xlu0 %v293, 64
    %v296 = vpop.permute.xlu0 %295
    %vm298 = vcmask 254976
    %299 = vst.msk [vmem:[#allocation9] sm:$0x3] %vm298, %v296
    %vm300 = vcmask 517376
    %301 = vst.msk [vmem:[#allocation9 + $0xe] sm:$0x3] %vm300, %v296
    %v302 = vld [vmem:[#allocation2] sm:$0xc]
    %v303 = vld [vmem:[#allocation2 + $0x8] sm:$0xc]
    %v304 = vsel %vm200, %v296, 0
    %306 = vmatprep.subr.mxu0 %v170
    %307 = vmatpush1.msra.mxu0 %v169
    %308 = vmatprep.subr.mxu0 %v172
    %309 = vmatpush1.msra.mxu0 %v171
    %310 = vmatprep.subr.mxu0 %v174
    %311 = vmatpush1.msra.mxu0 %v173
    %312 = vmatprep.subr.mxu0 %v176
    %313 = vmatpush1.msra.mxu0 %v175
    %314 = vmatprep.subr.mxu0 %v178
    %315 = vmatpush1.msra.mxu0 %v177
    %316 = vmatprep.subr.mxu0 %v180
    %317 = vmatpush1.msra.mxu0 %v179
    %318 = vmatprep.subr.mxu0 %v182
    %319 = vmatpush1.msra.mxu0 %v181
    %320 = vmatprep.subr.mxu0 %v184
    %321 = vmatpush1.msra.mxu0 %v183
    %322 = vmatprep.subr.mxu0 0.0
    %323 = vmatpush1.msra.mxu0 0.0
    %324 = vmatprep.subr.mxu0 0.0
    %325 = vmatpush1.msra.mxu0 0.0
    %326 = vmatprep.subr.mxu0 0.0
    %327 = vmatpush1.msra.mxu0 0.0
    %328 = vmatprep.subr.mxu0 0.0
    %329 = vmatpush1.msra.mxu0 0.0
    %330 = vmatprep.subr.mxu0 0.0
    %331 = vmatpush1.msra.mxu0 0.0
    %332 = vmatprep.subr.mxu0 0.0
    %333 = vmatpush1.msra.mxu0 0.0
    %334 = vmatprep.subr.mxu0 0.0
    %335 = vmatpush1.msra.mxu0 0.0
    %336 = vmatprep.subr.mxu0 0.0
    %337 = vmatpush1.msra.mxu0 0.0
    %338 = vmatprep.subr.mxu0 0.0
    %339 = vmatpush1.msra.mxu0 0.0
    %340 = vmatprep.subr.mxu0 0.0
    %341 = vmatpush1.msra.mxu0 0.0
    %342 = vmatprep.subr.mxu0 0.0
    %343 = vmatpush1.msra.mxu0 0.0
    %344 = vmatprep.subr.mxu0 0.0
    %345 = vmatpush1.msra.mxu0 0.0
    %346 = vmatprep.subr.mxu0 0.0
    %347 = vmatpush1.msra.mxu0 0.0
    %348 = vmatprep.subr.mxu0 0.0
    %349 = vmatpush1.msra.mxu0 0.0
    %350 = vmatprep.subr.mxu0 0.0
    %351 = vmatpush1.msra.mxu0 0.0
    %352 = vmatprep.subr.mxu0 0.0
    %353 = vmatpush1.msra.mxu0 0.0
    %354 = vmatprep.subr.mxu0 0.0
    %355 = vmatpush1.msra.mxu0 0.0
    %356 = vmatprep.subr.mxu0 0.0
    %357 = vmatpush1.msra.mxu0 0.0
    %358 = vmatprep.subr.mxu0 0.0
    %359 = vmatpush1.msra.mxu0 0.0
    %360 = vmatprep.subr.mxu0 0.0
    %361 = vmatpush1.msra.mxu0 0.0
    %362 = vmatprep.subr.mxu0 0.0
    %363 = vmatpush1.msra.mxu0 0.0
    %364 = vmatprep.subr.mxu0 0.0
    %365 = vmatpush1.msra.mxu0 0.0
    %366 = vmatprep.subr.mxu0 0.0
    %367 = vmatpush1.msra.mxu0 0.0
    %368 = vmatprep.subr.mxu0 0.0
    %369 = vmatpush1.msra.mxu0 0.0
    %370 = vmatprep.mubr.f32.mxu0 0.0
    %371 = vmatmul.mubr.f32.gmra.mrb[0].mxu0 %v304
    %v372 = vpop.f32.mrb[0].mxu0
    %v373 = vadd.f32 0.0, %v372
    %v374 = vpop.f32.mrb[0].mxu0
    %v375 = vadd.f32 0.0, %v374
    %376 = vdwg.mxu0
    %v379 = vrot.slane %v373, 6
    %v380 = vrot.slane %v375, 6
    %v383 = vadd.f32 %v302, %v379
    %v384 = vadd.f32 %v303, %v380
    %v385 = vmul.f32 %v383, %v194
    %v386 = vmul.f32 %v384, %v195
    %v387 = vtanh.pop %v385
    %v388 = vtanh.pop %v386
    %v389 = vmul.f32 %v387, %v194
    %v390 = vmul.f32 %v388, %v195
    %v391 = vadd.f32 %v389, %v196
    %v392 = vadd.f32 %v390, %v197
    %v394 = vrot.slane %v291, 6
    %v396 = vmul.f32 %v391, %v394
    %v397 = vmul.f32 %v391, %v392
    %399 = vrot.lane.b32.xlu0 %v397, 64
    %v400 = vpop.permute.xlu0 %399
    %v402 = vadd.f32 %v396, %v400
    %v403 = vtanh.pop %v402
    %v404 = vmul.f32 %v392, %v403
    %406 = vrot.lane.b32.xlu0 %v404, 64
    %v407 = vpop.permute.xlu0 %406
    %vm409 = vcmask 257026
    %410 = vst.msk [vmem:[#allocation9] sm:$0xc] %vm409, %v407
    %vm411 = vcmask 519426
    %412 = vst.msk [vmem:[#allocation9 + $0xa] sm:$0xc] %vm411, %v407
    %v413 = vld [vmem:[#allocation2] sm:$0x30]
    %v414 = vld [vmem:[#allocation2 + $0x8] sm:$0x30]
    %v415 = vrot.slane %v404, 2
    %416 = vrot.lane.b32.xlu0 %v415, 64
    %v417 = vpop.permute.xlu0 %416
    %v418 = vsel %vm200, %v417, 0
    %420 = vmatprep.subr.mxu0 %v170
    %421 = vmatpush1.msra.mxu0 %v169
    %422 = vmatprep.subr.mxu0 %v172
    %423 = vmatpush1.msra.mxu0 %v171
    %424 = vmatprep.subr.mxu0 %v174
    %425 = vmatpush1.msra.mxu0 %v173
    %426 = vmatprep.subr.mxu0 %v176
    %427 = vmatpush1.msra.mxu0 %v175
    %428 = vmatprep.subr.mxu0 %v178
    %429 = vmatpush1.msra.mxu0 %v177
    %430 = vmatprep.subr.mxu0 %v180
    %431 = vmatpush1.msra.mxu0 %v179
    %432 = vmatprep.subr.mxu0 %v182
    %433 = vmatpush1.msra.mxu0 %v181
    %434 = vmatprep.subr.mxu0 %v184
    %435 = vmatpush1.msra.mxu0 %v183
    %436 = vmatprep.subr.mxu0 0.0
    %437 = vmatpush1.msra.mxu0 0.0
    %438 = vmatprep.subr.mxu0 0.0
    %439 = vmatpush1.msra.mxu0 0.0
    %440 = vmatprep.subr.mxu0 0.0
    %441 = vmatpush1.msra.mxu0 0.0
    %442 = vmatprep.subr.mxu0 0.0
    %443 = vmatpush1.msra.mxu0 0.0
    %444 = vmatprep.subr.mxu0 0.0
    %445 = vmatpush1.msra.mxu0 0.0
    %446 = vmatprep.subr.mxu0 0.0
    %447 = vmatpush1.msra.mxu0 0.0
    %448 = vmatprep.subr.mxu0 0.0
    %449 = vmatpush1.msra.mxu0 0.0
    %450 = vmatprep.subr.mxu0 0.0
    %451 = vmatpush1.msra.mxu0 0.0
    %452 = vmatprep.subr.mxu0 0.0
    %453 = vmatpush1.msra.mxu0 0.0
    %454 = vmatprep.subr.mxu0 0.0
    %455 = vmatpush1.msra.mxu0 0.0
    %456 = vmatprep.subr.mxu0 0.0
    %457 = vmatpush1.msra.mxu0 0.0
    %458 = vmatprep.subr.mxu0 0.0
    %459 = vmatpush1.msra.mxu0 0.0
    %460 = vmatprep.subr.mxu0 0.0
    %461 = vmatpush1.msra.mxu0 0.0
    %462 = vmatprep.subr.mxu0 0.0
    %463 = vmatpush1.msra.mxu0 0.0
    %464 = vmatprep.subr.mxu0 0.0
    %465 = vmatpush1.msra.mxu0 0.0
    %466 = vmatprep.subr.mxu0 0.0
    %467 = vmatpush1.msra.mxu0 0.0
    %468 = vmatprep.subr.mxu0 0.0
    %469 = vmatpush1.msra.mxu0 0.0
    %470 = vmatprep.subr.mxu0 0.0
    %471 = vmatpush1.msra.mxu0 0.0
    %472 = vmatprep.subr.mxu0 0.0
    %473 = vmatpush1.msra.mxu0 0.0
    %474 = vmatprep.subr.mxu0 0.0
    %475 = vmatpush1.msra.mxu0 0.0
    %476 = vmatprep.subr.mxu0 0.0
    %477 = vmatpush1.msra.mxu0 0.0
    %478 = vmatprep.subr.mxu0 0.0
    %479 = vmatpush1.msra.mxu0 0.0
    %480 = vmatprep.subr.mxu0 0.0
    %481 = vmatpush1.msra.mxu0 0.0
    %482 = vmatprep.subr.mxu0 0.0
    %483 = vmatpush1.msra.mxu0 0.0
    %484 = vmatprep.mubr.f32.mxu0 0.0
    %485 = vmatmul.mubr.f32.gmra.mrb[0].mxu0 %v418
    %v486 = vpop.f32.mrb[0].mxu0
    %v487 = vadd.f32 0.0, %v486
    %v488 = vpop.f32.mrb[0].mxu0
    %v489 = vadd.f32 0.0, %v488
    %490 = vdwg.mxu0
    %v493 = vrot.slane %v487, 4
    %v494 = vrot.slane %v489, 4
    %v497 = vadd.f32 %v413, %v493
    %v498 = vadd.f32 %v414, %v494
    %v499 = vmul.f32 %v497, %v194
    %v500 = vmul.f32 %v498, %v195
    %v501 = vtanh.pop %v499
    %v502 = vtanh.pop %v500
    %v503 = vmul.f32 %v501, %v194
    %v504 = vmul.f32 %v502, %v195
    %v505 = vadd.f32 %v503, %v196
    %v506 = vadd.f32 %v504, %v197
    %v508 = vrot.slane %v402, 6
    %v510 = vmul.f32 %v505, %v508
    %v511 = vmul.f32 %v505, %v506
    %513 = vrot.lane.b32.xlu0 %v511, 64
    %v514 = vpop.permute.xlu0 %513
    %v516 = vadd.f32 %v510, %v514
    %v517 = vtanh.pop %v516
    %v518 = vmul.f32 %v506, %v517
    %520 = vrot.lane.b32.xlu0 %v518, 64
    %v521 = vpop.permute.xlu0 %520
    %vm523 = vcmask 259076
    %524 = vst.msk [vmem:[#allocation9] sm:$0x30] %vm523, %v521
    %vm525 = vcmask 521476
    %526 = vst.msk [vmem:[#allocation9 + $0x6] sm:$0x30] %vm525, %v521
    %v527 = vld [vmem:[#allocation2] sm:$0xc0]
    %v528 = vld [vmem:[#allocation2 + $0x8] sm:$0xc0]
    %v529 = vrot.slane %v518, 4
    %530 = vrot.lane.b32.xlu0 %v529, 64
    %v531 = vpop.permute.xlu0 %530
    %v532 = vsel %vm200, %v531, 0
    %534 = vmatprep.subr.mxu0 %v170
    %535 = vmatpush1.msra.mxu0 %v169
    %536 = vmatprep.subr.mxu0 %v172
    %537 = vmatpush1.msra.mxu0 %v171
    %538 = vmatprep.subr.mxu0 %v174
    %539 = vmatpush1.msra.mxu0 %v173
    %540 = vmatprep.subr.mxu0 %v176
    %541 = vmatpush1.msra.mxu0 %v175
    %542 = vmatprep.subr.mxu0 %v178
    %543 = vmatpush1.msra.mxu0 %v177
    %544 = vmatprep.subr.mxu0 %v180
    %545 = vmatpush1.msra.mxu0 %v179
    %546 = vmatprep.subr.mxu0 %v182
    %547 = vmatpush1.msra.mxu0 %v181
    %548 = vmatprep.subr.mxu0 %v184
    %549 = vmatpush1.msra.mxu0 %v183
    %550 = vmatprep.subr.mxu0 0.0
    %551 = vmatpush1.msra.mxu0 0.0
    %552 = vmatprep.subr.mxu0 0.0
    %553 = vmatpush1.msra.mxu0 0.0
    %554 = vmatprep.subr.mxu0 0.0
    %555 = vmatpush1.msra.mxu0 0.0
    %556 = vmatprep.subr.mxu0 0.0
    %557 = vmatpush1.msra.mxu0 0.0
    %558 = vmatprep.subr.mxu0 0.0
    %559 = vmatpush1.msra.mxu0 0.0
    %560 = vmatprep.subr.mxu0 0.0
    %561 = vmatpush1.msra.mxu0 0.0
    %562 = vmatprep.subr.mxu0 0.0
    %563 = vmatpush1.msra.mxu0 0.0
    %564 = vmatprep.subr.mxu0 0.0
    %565 = vmatpush1.msra.mxu0 0.0
    %566 = vmatprep.subr.mxu0 0.0
    %567 = vmatpush1.msra.mxu0 0.0
    %568 = vmatprep.subr.mxu0 0.0
    %569 = vmatpush1.msra.mxu0 0.0
    %570 = vmatprep.subr.mxu0 0.0
    %571 = vmatpush1.msra.mxu0 0.0
    %572 = vmatprep.subr.mxu0 0.0
    %573 = vmatpush1.msra.mxu0 0.0
    %574 = vmatprep.subr.mxu0 0.0
    %575 = vmatpush1.msra.mxu0 0.0
    %576 = vmatprep.subr.mxu0 0.0
    %577 = vmatpush1.msra.mxu0 0.0
    %578 = vmatprep.subr.mxu0 0.0
    %579 = vmatpush1.msra.mxu0 0.0
    %580 = vmatprep.subr.mxu0 0.0
    %581 = vmatpush1.msra.mxu0 0.0
    %582 = vmatprep.subr.mxu0 0.0
    %583 = vmatpush1.msra.mxu0 0.0
    %584 = vmatprep.subr.mxu0 0.0
    %585 = vmatpush1.msra.mxu0 0.0
    %586 = vmatprep.subr.mxu0 0.0
    %587 = vmatpush1.msra.mxu0 0.0
    %588 = vmatprep.subr.mxu0 0.0
    %589 = vmatpush1.msra.mxu0 0.0
    %590 = vmatprep.subr.mxu0 0.0
    %591 = vmatpush1.msra.mxu0 0.0
    %592 = vmatprep.subr.mxu0 0.0
    %593 = vmatpush1.msra.mxu0 0.0
    %594 = vmatprep.subr.mxu0 0.0
    %595 = vmatpush1.msra.mxu0 0.0
    %596 = vmatprep.subr.mxu0 0.0
    %597 = vmatpush1.msra.mxu0 0.0
    %598 = vmatprep.mubr.f32.mxu0 0.0
    %599 = vmatmul.mubr.f32.gmra.mrb[0].mxu0 %v532
    %v600 = vpop.f32.mrb[0].mxu0
    %v601 = vadd.f32 0.0, %v600
    %v602 = vpop.f32.mrb[0].mxu0
    %v603 = vadd.f32 0.0, %v602
    %604 = vdwg.mxu0
    %v607 = vrot.slane %v601, 2
    %v608 = vrot.slane %v603, 2
    %v611 = vadd.f32 %v527, %v607
    %v612 = vadd.f32 %v528, %v608
    %v613 = vmul.f32 %v611, %v194
    %v614 = vmul.f32 %v612, %v195
    %v615 = vtanh.pop %v613
    %v616 = vtanh.pop %v614
    %v617 = vmul.f32 %v615, %v194
    %v618 = vmul.f32 %v616, %v195
    %v619 = vadd.f32 %v617, %v196
    %v620 = vadd.f32 %v618, %v197
    %v622 = vrot.slane %v516, 6
    %v624 = vmul.f32 %v619, %v622
    %v625 = vmul.f32 %v619, %v620
    %627 = vrot.lane.b32.xlu0 %v625, 64
    %v628 = vpop.permute.xlu0 %627
    %v630 = vadd.f32 %v624, %v628
    %v631 = vtanh.pop %v630
    %v632 = vmul.f32 %v620, %v631
    %634 = vrot.lane.b32.xlu0 %v632, 64
    %v635 = vpop.permute.xlu0 %634
    %vm637 = vcmask 261126
    %638 = vst.msk [vmem:[#allocation9] sm:$0xc0] %vm637, %v635
    %vm639 = vcmask 523526
    %640 = vst.msk [vmem:[#allocation9 + $0x2] sm:$0xc0] %vm639, %v635
    %v641 = vld [vmem:[#allocation2 + $0x10] sm:$0x3]
    %v642 = vld [vmem:[#allocation2 + $0x18] sm:$0x3]
    %v643 = vrot.slane %v632, 6
    %644 = vrot.lane.b32.xlu0 %v643, 64
    %v645 = vpop.permute.xlu0 %644
    %v646 = vsel %vm200, %v645, 0
    %648 = vmatprep.subr.mxu0 %v170
    %649 = vmatpush1.msra.mxu0 %v169
    %650 = vmatprep.subr.mxu0 %v172
    %651 = vmatpush1.msra.mxu0 %v171
    %652 = vmatprep.subr.mxu0 %v174
    %653 = vmatpush1.msra.mxu0 %v173
    %654 = vmatprep.subr.mxu0 %v176
    %655 = vmatpush1.msra.mxu0 %v175
    %656 = vmatprep.subr.mxu0 %v178
    %657 = vmatpush1.msra.mxu0 %v177
    %658 = vmatprep.subr.mxu0 %v180
    %659 = vmatpush1.msra.mxu0 %v179
    %660 = vmatprep.subr.mxu0 %v182
    %661 = vmatpush1.msra.mxu0 %v181
    %662 = vmatprep.subr.mxu0 %v184
    %663 = vmatpush1.msra.mxu0 %v183
    %664 = vmatprep.subr.mxu0 0.0
    %665 = vmatpush1.msra.mxu0 0.0
    %666 = vmatprep.subr.mxu0 0.0
    %667 = vmatpush1.msra.mxu0 0.0
    %668 = vmatprep.subr.mxu0 0.0
    %669 = vmatpush1.msra.mxu0 0.0
    %670 = vmatprep.subr.mxu0 0.0
    %671 = vmatpush1.msra.mxu0 0.0
    %672 = vmatprep.subr.mxu0 0.0
    %673 = vmatpush1.msra.mxu0 0.0
    %674 = vmatprep.subr.mxu0 0.0
    %675 = vmatpush1.msra.mxu0 0.0
    %676 = vmatprep.subr.mxu0 0.0
    %677 = vmatpush1.msra.mxu0 0.0
    %678 = vmatprep.subr.mxu0 0.0
    %679 = vmatpush1.msra.mxu0 0.0
    %680 = vmatprep.subr.mxu0 0.0
    %681 = vmatpush1.msra.mxu0 0.0
    %682 = vmatprep.subr.mxu0 0.0
    %683 = vmatpush1.msra.mxu0 0.0
    %684 = vmatprep.subr.mxu0 0.0
    %685 = vmatpush1.msra.mxu0 0.0
    %686 = vmatprep.subr.mxu0 0.0
    %687 = vmatpush1.msra.mxu0 0.0
    %688 = vmatprep.subr.mxu0 0.0
    %689 = vmatpush1.msra.mxu0 0.0
    %690 = vmatprep.subr.mxu0 0.0
    %691 = vmatpush1.msra.mxu0 0.0
    %692 = vmatprep.subr.mxu0 0.0
    %693 = vmatpush1.msra.mxu0 0.0
    %694 = vmatprep.subr.mxu0 0.0
    %695 = vmatpush1.msra.mxu0 0.0
    %696 = vmatprep.subr.mxu0 0.0
    %697 = vmatpush1.msra.mxu0 0.0
    %698 = vmatprep.subr.mxu0 0.0
    %699 = vmatpush1.msra.mxu0 0.0
    %700 = vmatprep.subr.mxu0 0.0
    %701 = vmatpush1.msra.mxu0 0.0
    %702 = vmatprep.subr.mxu0 0.0
    %703 = vmatpush1.msra.mxu0 0.0
    %704 = vmatprep.subr.mxu0 0.0
    %705 = vmatpush1.msra.mxu0 0.0
    %706 = vmatprep.subr.mxu0 0.0
    %707 = vmatpush1.msra.mxu0 0.0
    %708 = vmatprep.subr.mxu0 0.0
    %709 = vmatpush1.msra.mxu0 0.0
    %710 = vmatprep.subr.mxu0 0.0
    %711 = vmatpush1.msra.mxu0 0.0
    %712 = vmatprep.mubr.f32.mxu0 0.0
    %713 = vmatmul.mubr.f32.gmra.mrb[0].mxu0 %v646
    %v714 = vpop.f32.mrb[0].mxu0
    %v715 = vadd.f32 0.0, %v714
    %v716 = vpop.f32.mrb[0].mxu0
    %v717 = vadd.f32 0.0, %v716
    %718 = vdwg.mxu0
    %v719 = vadd.f32 %v641, %v715
    %v720 = vadd.f32 %v642, %v717
    %v721 = vmul.f32 %v719, %v194
    %v722 = vmul.f32 %v720, %v195
    %v723 = vtanh.pop %v721
    %v724 = vtanh.pop %v722
    %v725 = vmul.f32 %v723, %v194
    %v726 = vmul.f32 %v724, %v195
    %v727 = vadd.f32 %v725, %v196
    %v728 = vadd.f32 %v726, %v197
    %v730 = vrot.slane %v630, 6
    %v732 = vmul.f32 %v727, %v730
    %v733 = vmul.f32 %v727, %v728
    %735 = vrot.lane.b32.xlu0 %v733, 64
    %v736 = vpop.permute.xlu0 %735
    %v738 = vadd.f32 %v732, %v736
    %v739 = vtanh.pop %v738
    %v740 = vmul.f32 %v728, %v739
    %742 = vrot.lane.b32.xlu0 %v740, 64
    %v743 = vpop.permute.xlu0 %742
    %745 = vst.msk [vmem:[#allocation9 + $0x8] sm:$0x3] %vm298, %v743
    %746 = vst.msk [vmem:[#allocation9 + $0x6] sm:$0x3] %vm300, %v743
    %v747 = vld [vmem:[#allocation2 + $0x10] sm:$0xc]
    %v748 = vld [vmem:[#allocation2 + $0x18] sm:$0xc]
    %v749 = vsel %vm200, %v743, 0
    %751 = vmatprep.subr.mxu0 %v170
    %752 = vmatpush1.msra.mxu0 %v169
    %753 = vmatprep.subr.mxu0 %v172
    %754 = vmatpush1.msra.mxu0 %v171
    %755 = vmatprep.subr.mxu0 %v174
    %756 = vmatpush1.msra.mxu0 %v173
    %757 = vmatprep.subr.mxu0 %v176
    %758 = vmatpush1.msra.mxu0 %v175
    %759 = vmatprep.subr.mxu0 %v178
    %760 = vmatpush1.msra.mxu0 %v177
    %761 = vmatprep.subr.mxu0 %v180
    %762 = vmatpush1.msra.mxu0 %v179
    %763 = vmatprep.subr.mxu0 %v182
    %764 = vmatpush1.msra.mxu0 %v181
    %765 = vmatprep.subr.mxu0 %v184
    %766 = vmatpush1.msra.mxu0 %v183
    %767 = vmatprep.subr.mxu0 0.0
    %768 = vmatpush1.msra.mxu0 0.0
    %769 = vmatprep.subr.mxu0 0.0
    %770 = vmatpush1.msra.mxu0 0.0
    %771 = vmatprep.subr.mxu0 0.0
    %772 = vmatpush1.msra.mxu0 0.0
    %773 = vmatprep.subr.mxu0 0.0
    %774 = vmatpush1.msra.mxu0 0.0
    %775 = vmatprep.subr.mxu0 0.0
    %776 = vmatpush1.msra.mxu0 0.0
    %777 = vmatprep.subr.mxu0 0.0
    %778 = vmatpush1.msra.mxu0 0.0
    %779 = vmatprep.subr.mxu0 0.0
    %780 = vmatpush1.msra.mxu0 0.0
    %781 = vmatprep.subr.mxu0 0.0
    %782 = vmatpush1.msra.mxu0 0.0
    %783 = vmatprep.subr.mxu0 0.0
    %784 = vmatpush1.msra.mxu0 0.0
    %785 = vmatprep.subr.mxu0 0.0
    %786 = vmatpush1.msra.mxu0 0.0
    %787 = vmatprep.subr.mxu0 0.0
    %788 = vmatpush1.msra.mxu0 0.0
    %789 = vmatprep.subr.mxu0 0.0
    %790 = vmatpush1.msra.mxu0 0.0
    %791 = vmatprep.subr.mxu0 0.0
    %792 = vmatpush1.msra.mxu0 0.0
    %793 = vmatprep.subr.mxu0 0.0
    %794 = vmatpush1.msra.mxu0 0.0
    %795 = vmatprep.subr.mxu0 0.0
    %796 = vmatpush1.msra.mxu0 0.0
    %797 = vmatprep.subr.mxu0 0.0
    %798 = vmatpush1.msra.mxu0 0.0
    %799 = vmatprep.subr.mxu0 0.0
    %800 = vmatpush1.msra.mxu0 0.0
    %801 = vmatprep.subr.mxu0 0.0
    %802 = vmatpush1.msra.mxu0 0.0
    %803 = vmatprep.subr.mxu0 0.0
    %804 = vmatpush1.msra.mxu0 0.0
    %805 = vmatprep.subr.mxu0 0.0
    %806 = vmatpush1.msra.mxu0 0.0
    %807 = vmatprep.subr.mxu0 0.0
    %808 = vmatpush1.msra.mxu0 0.0
    %809 = vmatprep.subr.mxu0 0.0
    %810 = vmatpush1.msra.mxu0 0.0
    %811 = vmatprep.subr.mxu0 0.0
    %812 = vmatpush1.msra.mxu0 0.0
    %813 = vmatprep.subr.mxu0 0.0
    %814 = vmatpush1.msra.mxu0 0.0
    %815 = vmatprep.mubr.f32.mxu0 0.0
    %816 = vmatmul.mubr.f32.gmra.mrb[0].mxu0 %v749
    %v817 = vpop.f32.mrb[0].mxu0
    %v818 = vadd.f32 0.0, %v817
    %v819 = vpop.f32.mrb[0].mxu0
    %v820 = vadd.f32 0.0, %v819
    %821 = vdwg.mxu0
    %v824 = vrot.slane %v818, 6
    %v825 = vrot.slane %v820, 6
    %v828 = vadd.f32 %v747, %v824
    %v829 = vadd.f32 %v748, %v825
    %v830 = vmul.f32 %v828, %v194
    %v831 = vmul.f32 %v829, %v195
    %v832 = vtanh.pop %v830
    %v833 = vtanh.pop %v831
    %v834 = vmul.f32 %v832, %v194
    %v835 = vmul.f32 %v833, %v195
    %v836 = vadd.f32 %v834, %v196
    %v837 = vadd.f32 %v835, %v197
    %v839 = vrot.slane %v738, 6
    %v841 = vmul.f32 %v836, %v839
    %v842 = vmul.f32 %v836, %v837
    %844 = vrot.lane.b32.xlu0 %v842, 64
    %v845 = vpop.permute.xlu0 %844
    %v847 = vadd.f32 %v841, %v845
    %v848 = vtanh.pop %v847
    %v849 = vmul.f32 %v837, %v848
    %851 = vrot.lane.b32.xlu0 %v849, 64
    %v852 = vpop.permute.xlu0 %851
    %854 = vst.msk [vmem:[#allocation9 + $0x8] sm:$0xc] %vm409, %v852
    %855 = vst.msk [vmem:[#allocation9 + $0x2] sm:$0xc] %vm411, %v852
    %v856 = vld [vmem:[#allocation2 + $0x10] sm:$0x30]
    %v857 = vld [vmem:[#allocation2 + $0x18] sm:$0x30]
    %v858 = vrot.slane %v849, 2
    %859 = vrot.lane.b32.xlu0 %v858, 64
    %v860 = vpop.permute.xlu0 %859
    %v861 = vsel %vm200, %v860, 0
    %863 = vmatprep.subr.mxu0 %v170
    %864 = vmatpush1.msra.mxu0 %v169
    %865 = vmatprep.subr.mxu0 %v172
    %866 = vmatpush1.msra.mxu0 %v171
    %867 = vmatprep.subr.mxu0 %v174
    %868 = vmatpush1.msra.mxu0 %v173
    %869 = vmatprep.subr.mxu0 %v176
    %870 = vmatpush1.msra.mxu0 %v175
    %871 = vmatprep.subr.mxu0 %v178
    %872 = vmatpush1.msra.mxu0 %v177
    %873 = vmatprep.subr.mxu0 %v180
    %874 = vmatpush1.msra.mxu0 %v179
    %875 = vmatprep.subr.mxu0 %v182
    %876 = vmatpush1.msra.mxu0 %v181
    %877 = vmatprep.subr.mxu0 %v184
    %878 = vmatpush1.msra.mxu0 %v183
    %879 = vmatprep.subr.mxu0 0.0
    %880 = vmatpush1.msra.mxu0 0.0
    %881 = vmatprep.subr.mxu0 0.0
    %882 = vmatpush1.msra.mxu0 0.0
    %883 = vmatprep.subr.mxu0 0.0
    %884 = vmatpush1.msra.mxu0 0.0
    %885 = vmatprep.subr.mxu0 0.0
    %886 = vmatpush1.msra.mxu0 0.0
    %887 = vmatprep.subr.mxu0 0.0
    %888 = vmatpush1.msra.mxu0 0.0
    %889 = vmatprep.subr.mxu0 0.0
    %890 = vmatpush1.msra.mxu0 0.0
    %891 = vmatprep.subr.mxu0 0.0
    %892 = vmatpush1.msra.mxu0 0.0
    %893 = vmatprep.subr.mxu0 0.0
    %894 = vmatpush1.msra.mxu0 0.0
    %895 = vmatprep.subr.mxu0 0.0
    %896 = vmatpush1.msra.mxu0 0.0
    %897 = vmatprep.subr.mxu0 0.0
    %898 = vmatpush1.msra.mxu0 0.0
    %899 = vmatprep.subr.mxu0 0.0
    %900 = vmatpush1.msra.mxu0 0.0
    %901 = vmatprep.subr.mxu0 0.0
    %902 = vmatpush1.msra.mxu0 0.0
    %903 = vmatprep.subr.mxu0 0.0
    %904 = vmatpush1.msra.mxu0 0.0
    %905 = vmatprep.subr.mxu0 0.0
    %906 = vmatpush1.msra.mxu0 0.0
    %907 = vmatprep.subr.mxu0 0.0
    %908 = vmatpush1.msra.mxu0 0.0
    %909 = vmatprep.subr.mxu0 0.0
    %910 = vmatpush1.msra.mxu0 0.0
    %911 = vmatprep.subr.mxu0 0.0
    %912 = vmatpush1.msra.mxu0 0.0
    %913 = vmatprep.subr.mxu0 0.0
    %914 = vmatpush1.msra.mxu0 0.0
    %915 = vmatprep.subr.mxu0 0.0
    %916 = vmatpush1.msra.mxu0 0.0
    %917 = vmatprep.subr.mxu0 0.0
    %918 = vmatpush1.msra.mxu0 0.0
    %919 = vmatprep.subr.mxu0 0.0
    %920 = vmatpush1.msra.mxu0 0.0
    %921 = vmatprep.subr.mxu0 0.0
    %922 = vmatpush1.msra.mxu0 0.0
    %923 = vmatprep.subr.mxu0 0.0
    %924 = vmatpush1.msra.mxu0 0.0
    %925 = vmatprep.subr.mxu0 0.0
    %926 = vmatpush1.msra.mxu0 0.0
    %927 = vmatprep.mubr.f32.mxu0 0.0
    %928 = vmatmul.mubr.f32.gmra.mrb[0].mxu0 %v861
    %v929 = vpop.f32.mrb[0].mxu0
    %v930 = vadd.f32 0.0, %v929
    %v931 = vpop.f32.mrb[0].mxu0
    %v932 = vadd.f32 0.0, %v931
    %933 = vdwg.mxu0
    %v936 = vrot.slane %v930, 4
    %v937 = vrot.slane %v932, 4
    %v940 = vadd.f32 %v856, %v936
    %v941 = vadd.f32 %v857, %v937
    %v942 = vmul.f32 %v940, %v194
    %v943 = vmul.f32 %v941, %v195
    %v944 = vtanh.pop %v942
    %v945 = vtanh.pop %v943
    %v946 = vmul.f32 %v944, %v194
    %v947 = vmul.f32 %v945, %v195
    %v948 = vadd.f32 %v946, %v196
    %v949 = vadd.f32 %v947, %v197
    %v951 = vrot.slane %v847, 6
    %v953 = vmul.f32 %v948, %v951
    %v954 = vmul.f32 %v948, %v949
    %956 = vrot.lane.b32.xlu0 %v954, 64
    %v957 = vpop.permute.xlu0 %956
    %v959 = vadd.f32 %v953, %v957
    %v960 = vtanh.pop %v959
    %v961 = vmul.f32 %v949, %v960
    %963 = vrot.lane.b32.xlu0 %v961, 64
    %v964 = vpop.permute.xlu0 %963
    %966 = vst.msk [vmem:[#allocation9 + $0x8] sm:$0x30] %vm523, %v964
    %967 = vst.msk [vmem:[#allocation9 - $0x2] sm:$0x30] %vm525, %v964
    %v968 = vld [vmem:[#allocation2 + $0x10] sm:$0xc0]
    %v969 = vld [vmem:[#allocation2 + $0x18] sm:$0xc0]
    %v970 = vrot.slane %v961, 4
    %971 = vrot.lane.b32.xlu0 %v970, 64
    %v972 = vpop.permute.xlu0 %971
    %v973 = vsel %vm200, %v972, 0
    %975 = vmatprep.subr.mxu0 %v170
    %976 = vmatpush1.msra.mxu0 %v169
    %977 = vmatprep.subr.mxu0 %v172
    %978 = vmatpush1.msra.mxu0 %v171
    %979 = vmatprep.subr.mxu0 %v174
    %980 = vmatpush1.msra.mxu0 %v173
    %981 = vmatprep.subr.mxu0 %v176
    %982 = vmatpush1.msra.mxu0 %v175
    %983 = vmatprep.subr.mxu0 %v178
    %984 = vmatpush1.msra.mxu0 %v177
    %985 = vmatprep.subr.mxu0 %v180
    %986 = vmatpush1.msra.mxu0 %v179
    %987 = vmatprep.subr.mxu0 %v182
    %988 = vmatpush1.msra.mxu0 %v181
    %989 = vmatprep.subr.mxu0 %v184
    %990 = vmatpush1.msra.mxu0 %v183
    %991 = vmatprep.subr.mxu0 0.0
    %992 = vmatpush1.msra.mxu0 0.0
    %993 = vmatprep.subr.mxu0 0.0
    %994 = vmatpush1.msra.mxu0 0.0
    %995 = vmatprep.subr.mxu0 0.0
    %996 = vmatpush1.msra.mxu0 0.0
    %997 = vmatprep.subr.mxu0 0.0
    %998 = vmatpush1.msra.mxu0 0.0
    %999 = vmatprep.subr.mxu0 0.0
    %1000 = vmatpush1.msra.mxu0 0.0
    %1001 = vmatprep.subr.mxu0 0.0
    %1002 = vmatpush1.msra.mxu0 0.0
    %1003 = vmatprep.subr.mxu0 0.0
    %1004 = vmatpush1.msra.mxu0 0.0
    %1005 = vmatprep.subr.mxu0 0.0
    %1006 = vmatpush1.msra.mxu0 0.0
    %1007 = vmatprep.subr.mxu0 0.0
    %1008 = vmatpush1.msra.mxu0 0.0
    %1009 = vmatprep.subr.mxu0 0.0
    %1010 = vmatpush1.msra.mxu0 0.0
    %1011 = vmatprep.subr.mxu0 0.0
    %1012 = vmatpush1.msra.mxu0 0.0
    %1013 = vmatprep.subr.mxu0 0.0
    %1014 = vmatpush1.msra.mxu0 0.0
    %1015 = vmatprep.subr.mxu0 0.0
    %1016 = vmatpush1.msra.mxu0 0.0
    %1017 = vmatprep.subr.mxu0 0.0
    %1018 = vmatpush1.msra.mxu0 0.0
    %1019 = vmatprep.subr.mxu0 0.0
    %1020 = vmatpush1.msra.mxu0 0.0
    %1021 = vmatprep.subr.mxu0 0.0
    %1022 = vmatpush1.msra.mxu0 0.0
    %1023 = vmatprep.subr.mxu0 0.0
    %1024 = vmatpush1.msra.mxu0 0.0
    %1025 = vmatprep.subr.mxu0 0.0
    %1026 = vmatpush1.msra.mxu0 0.0
    %1027 = vmatprep.subr.mxu0 0.0
    %1028 = vmatpush1.msra.mxu0 0.0
    %1029 = vmatprep.subr.mxu0 0.0
    %1030 = vmatpush1.msra.mxu0 0.0
    %1031 = vmatprep.subr.mxu0 0.0
    %1032 = vmatpush1.msra.mxu0 0.0
    %1033 = vmatprep.subr.mxu0 0.0
    %1034 = vmatpush1.msra.mxu0 0.0
    %1035 = vmatprep.subr.mxu0 0.0
    %1036 = vmatpush1.msra.mxu0 0.0
    %1037 = vmatprep.subr.mxu0 0.0
    %1038 = vmatpush1.msra.mxu0 0.0
    %1039 = vmatprep.mubr.f32.mxu0 0.0
    %1040 = vmatmul.mubr.f32.gmra.mrb[0].mxu0 %v973
    %v1041 = vpop.f32.mrb[0].mxu0
    %v1042 = vadd.f32 0.0, %v1041
    %v1043 = vpop.f32.mrb[0].mxu0
    %v1044 = vadd.f32 0.0, %v1043
    %1045 = vdwg.mxu0
    %v1048 = vrot.slane %v1042, 2
    %v1049 = vrot.slane %v1044, 2
    %v1052 = vadd.f32 %v968, %v1048
    %v1053 = vadd.f32 %v969, %v1049
    %v1054 = vmul.f32 %v1052, %v194
    %v1055 = vmul.f32 %v1053, %v195
    %v1056 = vtanh.pop %v1054
    %v1057 = vtanh.pop %v1055
    %v1058 = vmul.f32 %v1056, %v194
    %v1059 = vmul.f32 %v1057, %v195
    %v1060 = vadd.f32 %v1058, %v196
    %v1061 = vadd.f32 %v1059, %v197
    %v1063 = vrot.slane %v959, 6
    %v1065 = vmul.f32 %v1060, %v1063
    %v1066 = vmul.f32 %v1060, %v1061
    %1068 = vrot.lane.b32.xlu0 %v1066, 64
    %v1069 = vpop.permute.xlu0 %1068
    %v1071 = vadd.f32 %v1065, %v1069
    %v1072 = vtanh.pop %v1071
    %v1073 = vmul.f32 %v1061, %v1072
    %1075 = vrot.lane.b32.xlu0 %v1073, 64
    %v1076 = vpop.permute.xlu0 %1075
    %1078 = vst.msk [vmem:[#allocation9 + $0x8] sm:$0xc0] %vm637, %v1076
    %1079 = vst.msk [vmem:[#allocation9 - $0x6] sm:$0xc0] %vm639, %v1076
    // Predicated region
    $region30: #{tpu_custom_call.1} parent=1 // pred_check
      _
    $region31: #{tpu_custom_call.1} parent=1 // pred_check_branch
      %1081 = sbr.rel (0) target = $region33
    $region32: #{tpu_custom_call.1} parent=1 // pred_region
      %s1083 = ssub.s32 256, 256
      %1084 = vsyncadd [#allocation5], %s1083
      %s1085 = sshll.u32 [#allocation9], 4
      %s1086 = int_to_ptr.vmem [resolvable:$true] %s1085
      %1091 = dma.vmem_to_hbm [thread:$0]  %s1086, 256, %s4, [#allocation5], 128, 128, 8
    $region33: #{tpu_custom_call.1} parent=1 // pred_fallthru
      _
    // Predicated region
    $region34: #{tpu_custom_call.1} parent=1 // pred_check
      _
    $region35: #{tpu_custom_call.1} parent=1 // pred_check_branch
      %1093 = sbr.rel (0) target = $region37
    $region36: #{tpu_custom_call.1} parent=1 // pred_region
      %1094 = dma.done [#allocation5], 256
    $region37: #{tpu_custom_call.1} parent=1 // pred_fallthru
      _
    %1095 = vsyncpa [#allocation4], 1
    %1096 = vsyncpa [#allocation7], 1
    %1097 = vsyncpa [#allocation5], 1

</llo_original>
